<compile_context>
chip_gen: v5e
topology: v5e:2x2
jax: 0.10.0
libtpu: 0.0.40
codegen_flags: <defaults>
</compile_context>

<pallas_src>
import functools

import jax
import jax.numpy as jnp
from jax import lax
from jax.experimental import pallas as pl
from jax.experimental.pallas import tpu as pltpu

F32 = jnp.float32
MXU_DTYPE = jnp.float32   # set to jnp.bfloat16 on v6e/v7x for faster MXU passes

ENC_CH = [(1, 16), (16, 32), (32, 64), (64, 128)]
DEC_CH = [(128, 64), (64, 32), (32, 16), (16, 1)]
K_SIZE = 3
P0 = 16                    # initial lane-phase count == 2 ** (#encoder layers)


# ----------------------------------------------------------------------------
# In-kernel helpers (values only; everything stays on-chip)
# ----------------------------------------------------------------------------
def _mm(a, w):
    return jnp.dot(a.astype(MXU_DTYPE), w.astype(MXU_DTYPE),
                   preferred_element_type=F32)


def _cat_rows(xs):
    return xs[0] if len(xs) == 1 else jnp.concatenate(xs, axis=0)


def _boundary_masks(r, t_rows):
    """(r,1) bool masks of sample-start / sample-end rows (t_rows rows/sample)."""
    row = lax.broadcasted_iota(jnp.int32, (r, 1), 0)
    start = row == 0
    end = row == (t_rows - 1)
    for k in range(1, r // t_rows):
        start = jnp.logical_or(start, row == k * t_rows)
        end = jnp.logical_or(end, row == k * t_rows + t_rows - 1)
    return start, end


def _shift_down(x, start_mask):
    """y[r] = x[r-1] within each sample; 0 at sample-start rows (left pad)."""
    return jnp.where(start_mask, 0.0, pltpu.roll(x, 1, 0))


def _shift_up(x, end_mask):
    """y[r] = x[r+1] within each sample; 0 at sample-end rows (right pad)."""
    return jnp.where(end_mask, 0.0, pltpu.roll(x, x.shape[0] - 1, 0))


def _enc_layer(phases, w_ref, b_ref, *, relu, start_mask):
    """Conv1d(k=3, s=2, p=1) in phase form.

    phases: list of P arrays (R, Cin); phase p, row t holds position t*P + p.
    Returns list of P//2 arrays (R, Cout) (phase q <-> position t*(P/2)+q).
    """
    p_in = len(phases)
    p_out = p_in // 2
    r = phases[0].shape[0]
    w0, w1, w2 = w_ref[0], w_ref[1], w_ref[2]       # (Cin, Cout) each
    b = b_ref[...]                                  # (1, Cout)
    # taps for output phase q: x[2s-1], x[2s], x[2s+1] with s = t*(P/2)+q
    xm = [_shift_down(phases[p_in - 1], start_mask)] + \
         [phases[2 * q - 1] for q in range(1, p_out)]
    xe = [phases[2 * q] for q in range(p_out)]
    xo = [phases[2 * q + 1] for q in range(p_out)]
    xm, xe, xo = _cat_rows(xm), _cat_rows(xe), _cat_rows(xo)
    if w0.shape[0] == 1:
        # Cin == 1 (first layer): VPU broadcast outer products, keep MXU idle.
        y = xm * w0 + xe * w1 + xo * w2 + b
    else:
        y = _mm(xm, w0) + _mm(xe, w1) + _mm(xo, w2) + b
    if relu:
        y = jnp.maximum(y, 0.0)
    return [y[q * r:(q + 1) * r, :] for q in range(p_out)]


def _dec_layer(phases, w_ref, b_ref, *, relu, end_mask):
    """ConvTranspose1d(k=3, s=2, p=1, op=1) in phase form (sub-pixel).

    z[2m] = y[m]@W1 + b ; z[2m+1] = y[m+1]@W0 + y[m]@W2 + b (y[M] := 0).
    Returns list of 2*P arrays (R, Cout).
    """
    p_in = len(phases)
    r = phases[0].shape[0]
    w0, w1, w2 = w_ref[0], w_ref[1], w_ref[2]       # (Cin, Cout) each
    b = b_ref[...]
    xn = [phases[u + 1] for u in range(p_in - 1)] + [_shift_up(phases[0], end_mask)]
    xe_c, xn_c = _cat_rows(phases), _cat_rows(xn)
    ev = _mm(xe_c, w1) + b                          # output phases 2u
    od = _mm(xn_c, w0) + _mm(xe_c, w2) + b          # output phases 2u+1
    if relu:
        ev = jnp.maximum(ev, 0.0)
        od = jnp.maximum(od, 0.0)
    out = []
    for u in range(p_in):
        out.append(ev[u * r:(u + 1) * r, :])
        out.append(od[u * r:(u + 1) * r, :])
    return out


def _dec_last(phases, w_ref, b_ref, *, end_mask):
    """Last ConvTranspose1d (Cout=1): assemble the output directly as a
    lane-dense (R, 2*P) tile (lane j of row t = output position t*2P + j).
    w_ref holds (3, 1, Cin) rows; contraction done on the VPU/XLU."""
    p_in = len(phases)
    r = phases[0].shape[0]
    w0, w1, w2 = w_ref[0], w_ref[1], w_ref[2]       # (1, Cin) each
    b = b_ref[...]                                  # (1, 1)
    lane = lax.broadcasted_iota(jnp.int32, (1, 2 * p_in), 1)
    out = jnp.zeros((r, 2 * p_in), F32)
    for u in range(p_in):
        ye = phases[u]
        yn = phases[u + 1] if u + 1 < p_in else _shift_up(phases[0], end_mask)
        ev = jnp.sum(ye * w1, axis=1, keepdims=True) + b           # (R, 1)
        od = jnp.sum(yn * w0 + ye * w2, axis=1, keepdims=True) + b
        out = out + jnp.where(lane == 2 * u, ev, 0.0) \
                  + jnp.where(lane == 2 * u + 1, od, 0.0)
    return out


# ----------------------------------------------------------------------------
# Fused kernel: whole encoder + decoder for B_TILE samples per grid step
# ----------------------------------------------------------------------------
def _autoencoder_kernel(x_ref,
                        e1w, e1b, e2w, e2b, e3w, e3b, e4w, e4b,
                        d1w, d1b, d2w, d2b, d3w, d3b, d4w, d4b,
                        o_ref, *, t_rows):
    x = x_ref[...]                                  # (R, 16): lane p = pos t*16+p
    r = x.shape[0]
    start_mask, end_mask = _boundary_masks(r, t_rows)

    phases = [x[:, p:p + 1] for p in range(P0)]     # 16 phases of (R, 1)
    # encoder: Conv1d(s=2, p=1) x4, ReLU after the first three
    phases = _enc_layer(phases, e1w, e1b, relu=True, start_mask=start_mask)
    phases = _enc_layer(phases, e2w, e2b, relu=True, start_mask=start_mask)
    phases = _enc_layer(phases, e3w, e3b, relu=True, start_mask=start_mask)
    phases = _enc_layer(phases, e4w, e4b, relu=False, start_mask=start_mask)
    # decoder: ConvTranspose1d(s=2, p=1, op=1) x4, ReLU after the first three
    phases = _dec_layer(phases, d1w, d1b, relu=True, end_mask=end_mask)
    phases = _dec_layer(phases, d2w, d2b, relu=True, end_mask=end_mask)
    phases = _dec_layer(phases, d3w, d3b, relu=True, end_mask=end_mask)
    out = _dec_last(phases, d4w, d4b, end_mask=end_mask)           # (R, 16)
    o_ref[...] = out.astype(o_ref.dtype)


# ----------------------------------------------------------------------------
# Host-side wrapper
# ----------------------------------------------------------------------------
def _const_index_map(ndim):
    zeros = (0,) * ndim
    return lambda i: zeros


def autoencoder_forward(params, x_ncl, *, batch_tile=8):
    """x_ncl: (N, 1, L) float32 (PyTorch NCL). Returns (N, 1, L) float32."""
    n, c_in, l = x_ncl.shape
    assert c_in == 1 and l % P0 == 0 and l >= P0, (n, c_in, l)
    t_rows = l // P0                                # rows per sample

    # Pick a batch tile: >=2 grid steps when the batch allows (v7x megacore),
    # and block rows (bt * t_rows) a multiple of 8.
    bt = min(batch_tile, n)
    if bt == n and n > 1:
        bt = max(1, n // 2)
    while (bt * t_rows) % 8 != 0:
        bt += 1
    n_pad = -(-n // bt) * bt
    if n_pad != n:
        x_ncl = jnp.pad(x_ncl, ((0, n_pad - n), (0, 0), (0, 0)))

    # Free relayout: (N,1,L) row-major == (N*L/16, 16) lane-phase form.
    x2d = x_ncl.reshape(n_pad * t_rows, P0)

    # Per-tap, channels-last weight layout (tiny one-time transposes under jit).
    args = [x2d]
    for (w, b) in params["enc"]:
        args.append(jnp.transpose(w, (2, 1, 0)))        # (3, Cin, Cout)
        args.append(b.reshape(1, -1))
    n_dec = len(params["dec"])
    for i, (w, b) in enumerate(params["dec"]):
        if i < n_dec - 1:
            args.append(jnp.transpose(w, (2, 0, 1)))    # (3, Cin, Cout)
        else:
            args.append(jnp.transpose(w, (2, 1, 0)))    # (3, 1, Cin) rows (Cout==1)
        args.append(b.reshape(1, -1))

    r_blk = bt * t_rows
    in_specs = [pl.BlockSpec((r_blk, P0), lambda i: (i, 0))]
    for a_ in args[1:]:
        # Full-array blocks with constant index maps: weights DMA'd once and
        # kept VMEM resident across the (parallel) batch grid.
        in_specs.append(pl.BlockSpec(a_.shape, _const_index_map(a_.ndim)))

    # Advisory cost estimate (real conv FLOPs only).
    flops = 0
    lcur = l
    for ci, co in ENC_CH:
        lcur //= 2
        flops += 2 * K_SIZE * ci * co * lcur
    for ci, co in DEC_CH:
        flops += 2 * K_SIZE * ci * co * lcur
        lcur *= 2
    flops *= n_pad
    bytes_accessed = 4 * (2 * n_pad * l + sum(int(a.size) for a in args[1:]))

    out2d = pl.pallas_call(
        functools.partial(_autoencoder_kernel, t_rows=t_rows),
        out_shape=jax.ShapeDtypeStruct((n_pad * t_rows, P0), F32),
        grid=(n_pad // bt,),
        in_specs=in_specs,
        out_specs=pl.BlockSpec((r_blk, P0), lambda i: (i, 0)),
        compiler_params=pltpu.CompilerParams(
            dimension_semantics=("parallel",),
        ),
        cost_estimate=pl.CostEstimate(
            flops=int(flops), transcendentals=0,
            bytes_accessed=int(bytes_accessed)),
    )(*args)

    return out2d.reshape(n_pad, 1, l)[:n]               # free reshape back to NCL


# ----------------------------------------------------------------------------
# Parameters (deterministic, PyTorch-default-style uniform init)
# ----------------------------------------------------------------------------
def init_params(key):
    params = {"enc": [], "dec": []}
    keys = jax.random.split(key, 2 * (len(ENC_CH) + len(DEC_CH)))
    ki = 0
    for c_in, c_out in ENC_CH:
        bound = 1.0 / (c_in * K_SIZE) ** 0.5
        w = jax.random.uniform(keys[ki], (c_out, c_in, K_SIZE), F32, -bound, bound)
        b = jax.random.uniform(keys[ki + 1], (c_out,), F32, -bound, bound)
        params["enc"].append((w, b))
        ki += 2
    for c_in, c_out in DEC_CH:
        bound = 1.0 / (c_out * K_SIZE) ** 0.5
        w = jax.random.uniform(keys[ki], (c_in, c_out, K_SIZE), F32, -bound, bound)
        b = jax.random.uniform(keys[ki + 1], (c_out,), F32, -bound, bound)
        params["dec"].append((w, b))
        ki += 2
    return params


# ----------------------------------------------------------------------------
# Pure-JAX reference (im2col / dilate+flip formulation) for checking
# ----------------------------------------------------------------------------
def _ref_forward(params, x_ncl):
    x = jnp.transpose(x_ncl, (0, 2, 1))                       # (N, L, C)
    for i, (w, b) in enumerate(params["enc"]):
        n, l, ci = x.shape
        co, _, kk = w.shape
        lo = (l + 2 - kk) // 2 + 1
        xp = jnp.pad(x, ((0, 0), (1, 1), (0, 0)))
        idx = jnp.arange(lo)[:, None] * 2 + jnp.arange(kk)[None, :]
        patches = xp[:, idx, :].reshape(n * lo, kk * ci)
        w2 = jnp.transpose(w, (2, 1, 0)).reshape(kk * ci, co)
        y = patches @ w2 + b
        if i < 3:
            y = jnp.maximum(y, 0.0)
        x = y.reshape(n, lo, co)
    for i, (w, b) in enumerate(params["dec"]):
        n, l, ci = x.shape
        _, co, kk = w.shape
        ld = (l - 1) * 2 + 1
        xd = jnp.zeros((n, ld, ci), x.dtype).at[:, ::2, :].set(x)
        xp = jnp.pad(xd, ((0, 0), (1, 2), (0, 0)))
        lo = (l - 1) * 2 - 2 + kk + 1
        idx = jnp.arange(lo)[:, None] + jnp.arange(kk)[None, :]
        patches = xp[:, idx, :].reshape(n * lo, kk * ci)
        w_eq = jnp.transpose(w[:, :, ::-1], (2, 0, 1)).reshape(kk * ci, co)
        y = patches @ w_eq + b
        if i < 3:
            y = jnp.maximum(y, 0.0)
        x = y.reshape(n, lo, co)
    return jnp.transpose(x, (0, 2, 1))


if __name__ == "__main__":
    key = jax.random.PRNGKey(0)
    pkey, xkey = jax.random.split(key)
    params = init_params(pkey)

    # Input consistent with nn.Conv1d(1, ...): (batch=2, channels=1, length=64).
    x = jax.random.normal(xkey, (2, 1, 64), dtype=F32)

    fwd = jax.jit(autoencoder_forward)
    y = fwd(params, x)
    jax.block_until_ready(y)

    assert y.shape == x.shape, (y.shape, x.shape)
    assert y.dtype == F32

    # Correctness check against the pure-JAX reference.
    y_ref = jax.jit(_ref_forward)(params, x)
    err = float(jnp.max(jnp.abs(y - y_ref)))
    scale = float(jnp.max(jnp.abs(y_ref)))
    assert err <= 1e-3 + 1e-2 * scale, (err, scale)

    print("KERNEL_OK")
</pallas_src>

<mosaic_0001>
module attributes {stable_mosaic.version = 11 : i64} {
  func.func @_autoencoder_kernel(%arg0: i32, %arg1: memref<8x16xf32, #tpu.memory_space<vmem>>, %arg2: memref<3x1x16xf32, #tpu.memory_space<vmem>>, %arg3: memref<1x16xf32, #tpu.memory_space<vmem>>, %arg4: memref<3x16x32xf32, #tpu.memory_space<vmem>>, %arg5: memref<1x32xf32, #tpu.memory_space<vmem>>, %arg6: memref<3x32x64xf32, #tpu.memory_space<vmem>>, %arg7: memref<1x64xf32, #tpu.memory_space<vmem>>, %arg8: memref<3x64x128xf32, #tpu.memory_space<vmem>>, %arg9: memref<1x128xf32, #tpu.memory_space<vmem>>, %arg10: memref<3x128x64xf32, #tpu.memory_space<vmem>>, %arg11: memref<1x64xf32, #tpu.memory_space<vmem>>, %arg12: memref<3x64x32xf32, #tpu.memory_space<vmem>>, %arg13: memref<1x32xf32, #tpu.memory_space<vmem>>, %arg14: memref<3x32x16xf32, #tpu.memory_space<vmem>>, %arg15: memref<1x16xf32, #tpu.memory_space<vmem>>, %arg16: memref<3x1x16xf32, #tpu.memory_space<vmem>>, %arg17: memref<1x1xf32, #tpu.memory_space<vmem>>, %arg18: memref<8x16xf32, #tpu.memory_space<vmem>>) attributes {dimension_semantics = [#tpu.dimension_semantics<parallel>], iteration_bounds = array<i64: 1>, scalar_prefetch = 0 : i64, scratch_operands = 0 : i64, tpu.core_type = #tpu.core_type<tc>, window_params = [{transform_indices = @transform_0, window_bounds = array<i64: 8, 16>}, {pipeline_mode = #tpu.pipeline_mode<synchronous>, transform_indices = @transform_1, window_bounds = array<i64: 3, 1, 16>}, {pipeline_mode = #tpu.pipeline_mode<synchronous>, transform_indices = @transform_2, window_bounds = array<i64: 1, 16>}, {pipeline_mode = #tpu.pipeline_mode<synchronous>, transform_indices = @transform_3, window_bounds = array<i64: 3, 16, 32>}, {pipeline_mode = #tpu.pipeline_mode<synchronous>, transform_indices = @transform_4, window_bounds = array<i64: 1, 32>}, {pipeline_mode = #tpu.pipeline_mode<synchronous>, transform_indices = @transform_5, window_bounds = array<i64: 3, 32, 64>}, {pipeline_mode = #tpu.pipeline_mode<synchronous>, transform_indices = @transform_6, window_bounds = array<i64: 1, 64>}, {pipeline_mode = #tpu.pipeline_mode<synchronous>, transform_indices = @transform_7, window_bounds = array<i64: 3, 64, 128>}, {pipeline_mode = #tpu.pipeline_mode<synchronous>, transform_indices = @transform_8, window_bounds = array<i64: 1, 128>}, {pipeline_mode = #tpu.pipeline_mode<synchronous>, transform_indices = @transform_9, window_bounds = array<i64: 3, 128, 64>}, {pipeline_mode = #tpu.pipeline_mode<synchronous>, transform_indices = @transform_10, window_bounds = array<i64: 1, 64>}, {pipeline_mode = #tpu.pipeline_mode<synchronous>, transform_indices = @transform_11, window_bounds = array<i64: 3, 64, 32>}, {pipeline_mode = #tpu.pipeline_mode<synchronous>, transform_indices = @transform_12, window_bounds = array<i64: 1, 32>}, {pipeline_mode = #tpu.pipeline_mode<synchronous>, transform_indices = @transform_13, window_bounds = array<i64: 3, 32, 16>}, {pipeline_mode = #tpu.pipeline_mode<synchronous>, transform_indices = @transform_14, window_bounds = array<i64: 1, 16>}, {pipeline_mode = #tpu.pipeline_mode<synchronous>, transform_indices = @transform_15, window_bounds = array<i64: 3, 1, 16>}, {pipeline_mode = #tpu.pipeline_mode<synchronous>, transform_indices = @transform_16, window_bounds = array<i64: 1, 1>}, {transform_indices = @transform_17, window_bounds = array<i64: 8, 16>}]} {
    %c0 = arith.constant 0 : index
    %c0_0 = arith.constant 0 : index
    %0 = vector.load %arg1[%c0, %c0_0] : memref<8x16xf32, #tpu.memory_space<vmem>>, vector<8x16xf32>
    %1 = tpu.iota {dimensions = array<i32: 0>} : vector<8x1xi32>
    %c0_i32 = arith.constant 0 : i32
    %2 = vector.broadcast %c0_i32 : i32 to vector<8x1xi32>
    %3 = arith.cmpi eq, %1, %2 : vector<8x1xi32>
    %c3_i32 = arith.constant 3 : i32
    %4 = vector.broadcast %c3_i32 : i32 to vector<8x1xi32>
    %5 = arith.cmpi eq, %1, %4 : vector<8x1xi32>
    %c4_i32 = arith.constant 4 : i32
    %6 = vector.broadcast %c4_i32 : i32 to vector<8x1xi32>
    %7 = arith.cmpi eq, %1, %6 : vector<8x1xi32>
    %8 = arith.ori %3, %7 : vector<8x1xi1>
    %c7_i32 = arith.constant 7 : i32
    %9 = vector.broadcast %c7_i32 : i32 to vector<8x1xi32>
    %10 = arith.cmpi eq, %1, %9 : vector<8x1xi32>
    %11 = arith.ori %5, %10 : vector<8x1xi1>
    %12 = vector.extract_strided_slice %0 {offsets = [0, 0], sizes = [8, 1], strides = [1, 1]} : vector<8x16xf32> to vector<8x1xf32>
    %13 = vector.extract_strided_slice %0 {offsets = [0, 1], sizes = [8, 1], strides = [1, 1]} : vector<8x16xf32> to vector<8x1xf32>
    %14 = vector.extract_strided_slice %0 {offsets = [0, 2], sizes = [8, 1], strides = [1, 1]} : vector<8x16xf32> to vector<8x1xf32>
    %15 = vector.extract_strided_slice %0 {offsets = [0, 3], sizes = [8, 1], strides = [1, 1]} : vector<8x16xf32> to vector<8x1xf32>
    %16 = vector.extract_strided_slice %0 {offsets = [0, 4], sizes = [8, 1], strides = [1, 1]} : vector<8x16xf32> to vector<8x1xf32>
    %17 = vector.extract_strided_slice %0 {offsets = [0, 5], sizes = [8, 1], strides = [1, 1]} : vector<8x16xf32> to vector<8x1xf32>
    %18 = vector.extract_strided_slice %0 {offsets = [0, 6], sizes = [8, 1], strides = [1, 1]} : vector<8x16xf32> to vector<8x1xf32>
    %19 = vector.extract_strided_slice %0 {offsets = [0, 7], sizes = [8, 1], strides = [1, 1]} : vector<8x16xf32> to vector<8x1xf32>
    %20 = vector.extract_strided_slice %0 {offsets = [0, 8], sizes = [8, 1], strides = [1, 1]} : vector<8x16xf32> to vector<8x1xf32>
    %21 = vector.extract_strided_slice %0 {offsets = [0, 9], sizes = [8, 1], strides = [1, 1]} : vector<8x16xf32> to vector<8x1xf32>
    %22 = vector.extract_strided_slice %0 {offsets = [0, 10], sizes = [8, 1], strides = [1, 1]} : vector<8x16xf32> to vector<8x1xf32>
    %23 = vector.extract_strided_slice %0 {offsets = [0, 11], sizes = [8, 1], strides = [1, 1]} : vector<8x16xf32> to vector<8x1xf32>
    %24 = vector.extract_strided_slice %0 {offsets = [0, 12], sizes = [8, 1], strides = [1, 1]} : vector<8x16xf32> to vector<8x1xf32>
    %25 = vector.extract_strided_slice %0 {offsets = [0, 13], sizes = [8, 1], strides = [1, 1]} : vector<8x16xf32> to vector<8x1xf32>
    %26 = vector.extract_strided_slice %0 {offsets = [0, 14], sizes = [8, 1], strides = [1, 1]} : vector<8x16xf32> to vector<8x1xf32>
    %27 = vector.extract_strided_slice %0 {offsets = [0, 15], sizes = [8, 1], strides = [1, 1]} : vector<8x16xf32> to vector<8x1xf32>
    %c0_1 = arith.constant 0 : index
    %c0_2 = arith.constant 0 : index
    %c0_3 = arith.constant 0 : index
    %28 = vector.load %arg2[%c0_1, %c0_2, %c0_3] : memref<3x1x16xf32, #tpu.memory_space<vmem>>, vector<1x1x16xf32>
    %29 = vector.shape_cast %28 : vector<1x1x16xf32> to vector<1x16xf32>
    %c1 = arith.constant 1 : index
    %c0_4 = arith.constant 0 : index
    %c0_5 = arith.constant 0 : index
    %30 = vector.load %arg2[%c1, %c0_4, %c0_5] : memref<3x1x16xf32, #tpu.memory_space<vmem>>, vector<1x1x16xf32>
    %31 = vector.shape_cast %30 : vector<1x1x16xf32> to vector<1x16xf32>
    %c2 = arith.constant 2 : index
    %c0_6 = arith.constant 0 : index
    %c0_7 = arith.constant 0 : index
    %32 = vector.load %arg2[%c2, %c0_6, %c0_7] : memref<3x1x16xf32, #tpu.memory_space<vmem>>, vector<1x1x16xf32>
    %33 = vector.shape_cast %32 : vector<1x1x16xf32> to vector<1x16xf32>
    %c0_8 = arith.constant 0 : index
    %c0_9 = arith.constant 0 : index
    %34 = vector.load %arg3[%c0_8, %c0_9] : memref<1x16xf32, #tpu.memory_space<vmem>>, vector<1x16xf32>
    %c1_i32 = arith.constant 1 : i32
    %35 = tpu.dynamic_rotate %27 by %c1_i32 dim 0 : vector<8x1xf32>, i32 -> vector<8x1xf32>
    %cst = arith.constant 0.000000e+00 : f32
    %36 = vector.broadcast %cst : f32 to vector<8x1xf32>
    %37 = arith.select %8, %36, %35 : vector<8x1xi1>, vector<8x1xf32>
    %38 = tpu.concatenate %37, %13, %15, %17, %19, %21, %23, %25 in 0 : vector<8x1xf32>, vector<8x1xf32>, vector<8x1xf32>, vector<8x1xf32>, vector<8x1xf32>, vector<8x1xf32>, vector<8x1xf32>, vector<8x1xf32> -> vector<64x1xf32>
    %39 = tpu.concatenate %12, %14, %16, %18, %20, %22, %24, %26 in 0 : vector<8x1xf32>, vector<8x1xf32>, vector<8x1xf32>, vector<8x1xf32>, vector<8x1xf32>, vector<8x1xf32>, vector<8x1xf32>, vector<8x1xf32> -> vector<64x1xf32>
    %40 = tpu.concatenate %13, %15, %17, %19, %21, %23, %25, %27 in 0 : vector<8x1xf32>, vector<8x1xf32>, vector<8x1xf32>, vector<8x1xf32>, vector<8x1xf32>, vector<8x1xf32>, vector<8x1xf32>, vector<8x1xf32> -> vector<64x1xf32>
    %41 = vector.broadcast %38 : vector<64x1xf32> to vector<64x16xf32>
    %42 = vector.broadcast %29 : vector<1x16xf32> to vector<64x16xf32>
    %43 = arith.mulf %41, %42 : vector<64x16xf32>
    %44 = vector.broadcast %39 : vector<64x1xf32> to vector<64x16xf32>
    %45 = vector.broadcast %31 : vector<1x16xf32> to vector<64x16xf32>
    %46 = arith.mulf %44, %45 : vector<64x16xf32>
    %47 = arith.addf %43, %46 : vector<64x16xf32>
    %48 = vector.broadcast %40 : vector<64x1xf32> to vector<64x16xf32>
    %49 = vector.broadcast %33 : vector<1x16xf32> to vector<64x16xf32>
    %50 = arith.mulf %48, %49 : vector<64x16xf32>
    %51 = arith.addf %47, %50 : vector<64x16xf32>
    %52 = vector.broadcast %34 : vector<1x16xf32> to vector<64x16xf32>
    %53 = arith.addf %51, %52 : vector<64x16xf32>
    %cst_10 = arith.constant 0.000000e+00 : f32
    %54 = vector.broadcast %cst_10 : f32 to vector<64x16xf32>
    %55 = arith.maximumf %53, %54 : vector<64x16xf32>
    %56 = vector.extract_strided_slice %55 {offsets = [0, 0], sizes = [8, 16], strides = [1, 1]} : vector<64x16xf32> to vector<8x16xf32>
    %57 = vector.extract_strided_slice %55 {offsets = [8, 0], sizes = [8, 16], strides = [1, 1]} : vector<64x16xf32> to vector<8x16xf32>
    %58 = vector.extract_strided_slice %55 {offsets = [16, 0], sizes = [8, 16], strides = [1, 1]} : vector<64x16xf32> to vector<8x16xf32>
    %59 = vector.extract_strided_slice %55 {offsets = [24, 0], sizes = [8, 16], strides = [1, 1]} : vector<64x16xf32> to vector<8x16xf32>
    %60 = vector.extract_strided_slice %55 {offsets = [32, 0], sizes = [8, 16], strides = [1, 1]} : vector<64x16xf32> to vector<8x16xf32>
    %61 = vector.extract_strided_slice %55 {offsets = [40, 0], sizes = [8, 16], strides = [1, 1]} : vector<64x16xf32> to vector<8x16xf32>
    %62 = vector.extract_strided_slice %55 {offsets = [48, 0], sizes = [8, 16], strides = [1, 1]} : vector<64x16xf32> to vector<8x16xf32>
    %63 = vector.extract_strided_slice %55 {offsets = [56, 0], sizes = [8, 16], strides = [1, 1]} : vector<64x16xf32> to vector<8x16xf32>
    %c0_11 = arith.constant 0 : index
    %c0_12 = arith.constant 0 : index
    %c0_13 = arith.constant 0 : index
    %64 = vector.load %arg4[%c0_11, %c0_12, %c0_13] : memref<3x16x32xf32, #tpu.memory_space<vmem>>, vector<1x16x32xf32>
    %65 = vector.shape_cast %64 : vector<1x16x32xf32> to vector<16x32xf32>
    %c1_14 = arith.constant 1 : index
    %c0_15 = arith.constant 0 : index
    %c0_16 = arith.constant 0 : index
    %66 = vector.load %arg4[%c1_14, %c0_15, %c0_16] : memref<3x16x32xf32, #tpu.memory_space<vmem>>, vector<1x16x32xf32>
    %67 = vector.shape_cast %66 : vector<1x16x32xf32> to vector<16x32xf32>
    %c2_17 = arith.constant 2 : index
    %c0_18 = arith.constant 0 : index
    %c0_19 = arith.constant 0 : index
    %68 = vector.load %arg4[%c2_17, %c0_18, %c0_19] : memref<3x16x32xf32, #tpu.memory_space<vmem>>, vector<1x16x32xf32>
    %69 = vector.shape_cast %68 : vector<1x16x32xf32> to vector<16x32xf32>
    %c0_20 = arith.constant 0 : index
    %c0_21 = arith.constant 0 : index
    %70 = vector.load %arg5[%c0_20, %c0_21] : memref<1x32xf32, #tpu.memory_space<vmem>>, vector<1x32xf32>
    %c1_i32_22 = arith.constant 1 : i32
    %71 = tpu.dynamic_rotate %63 by %c1_i32_22 dim 0 : vector<8x16xf32>, i32 -> vector<8x16xf32>
    %cst_23 = arith.constant 0.000000e+00 : f32
    %72 = vector.shape_cast %8 : vector<8x1xi1> to vector<8x1xi1>
    %73 = vector.broadcast %72 : vector<8x1xi1> to vector<8x16xi1>
    %74 = vector.broadcast %cst_23 : f32 to vector<8x16xf32>
    %75 = arith.select %73, %74, %71 : vector<8x16xi1>, vector<8x16xf32>
    %76 = tpu.concatenate %75, %57, %59, %61 in 0 : vector<8x16xf32>, vector<8x16xf32>, vector<8x16xf32>, vector<8x16xf32> -> vector<32x16xf32>
    %77 = tpu.concatenate %56, %58, %60, %62 in 0 : vector<8x16xf32>, vector<8x16xf32>, vector<8x16xf32>, vector<8x16xf32> -> vector<32x16xf32>
    %78 = tpu.concatenate %57, %59, %61, %63 in 0 : vector<8x16xf32>, vector<8x16xf32>, vector<8x16xf32>, vector<8x16xf32> -> vector<32x16xf32>
    %cst_24 = arith.constant dense<0.000000e+00> : vector<32x32xf32>
    %79 = tpu.matmul %76, %65, %cst_24 {dimension_numbers = #tpu.dot_dimension_numbers<[1], [0], [0], [1], [0, 0, 1, 1], [], []>} : vector<32x16xf32>, vector<16x32xf32>, vector<32x32xf32> -> vector<32x32xf32>
    %cst_25 = arith.constant dense<0.000000e+00> : vector<32x32xf32>
    %80 = tpu.matmul %77, %67, %cst_25 {dimension_numbers = #tpu.dot_dimension_numbers<[1], [0], [0], [1], [0, 0, 1, 1], [], []>} : vector<32x16xf32>, vector<16x32xf32>, vector<32x32xf32> -> vector<32x32xf32>
    %81 = arith.addf %79, %80 : vector<32x32xf32>
    %cst_26 = arith.constant dense<0.000000e+00> : vector<32x32xf32>
    %82 = tpu.matmul %78, %69, %cst_26 {dimension_numbers = #tpu.dot_dimension_numbers<[1], [0], [0], [1], [0, 0, 1, 1], [], []>} : vector<32x16xf32>, vector<16x32xf32>, vector<32x32xf32> -> vector<32x32xf32>
    %83 = arith.addf %81, %82 : vector<32x32xf32>
    %84 = vector.broadcast %70 : vector<1x32xf32> to vector<32x32xf32>
    %85 = arith.addf %83, %84 : vector<32x32xf32>
    %cst_27 = arith.constant 0.000000e+00 : f32
    %86 = vector.broadcast %cst_27 : f32 to vector<32x32xf32>
    %87 = arith.maximumf %85, %86 : vector<32x32xf32>
    %88 = vector.extract_strided_slice %87 {offsets = [0, 0], sizes = [8, 32], strides = [1, 1]} : vector<32x32xf32> to vector<8x32xf32>
    %89 = vector.extract_strided_slice %87 {offsets = [8, 0], sizes = [8, 32], strides = [1, 1]} : vector<32x32xf32> to vector<8x32xf32>
    %90 = vector.extract_strided_slice %87 {offsets = [16, 0], sizes = [8, 32], strides = [1, 1]} : vector<32x32xf32> to vector<8x32xf32>
    %91 = vector.extract_strided_slice %87 {offsets = [24, 0], sizes = [8, 32], strides = [1, 1]} : vector<32x32xf32> to vector<8x32xf32>
    %c0_28 = arith.constant 0 : index
    %c0_29 = arith.constant 0 : index
    %c0_30 = arith.constant 0 : index
    %92 = vector.load %arg6[%c0_28, %c0_29, %c0_30] : memref<3x32x64xf32, #tpu.memory_space<vmem>>, vector<1x32x64xf32>
    %93 = vector.shape_cast %92 : vector<1x32x64xf32> to vector<32x64xf32>
    %c1_31 = arith.constant 1 : index
    %c0_32 = arith.constant 0 : index
    %c0_33 = arith.constant 0 : index
    %94 = vector.load %arg6[%c1_31, %c0_32, %c0_33] : memref<3x32x64xf32, #tpu.memory_space<vmem>>, vector<1x32x64xf32>
    %95 = vector.shape_cast %94 : vector<1x32x64xf32> to vector<32x64xf32>
    %c2_34 = arith.constant 2 : index
    %c0_35 = arith.constant 0 : index
    %c0_36 = arith.constant 0 : index
    %96 = vector.load %arg6[%c2_34, %c0_35, %c0_36] : memref<3x32x64xf32, #tpu.memory_space<vmem>>, vector<1x32x64xf32>
    %97 = vector.shape_cast %96 : vector<1x32x64xf32> to vector<32x64xf32>
    %c0_37 = arith.constant 0 : index
    %c0_38 = arith.constant 0 : index
    %98 = vector.load %arg7[%c0_37, %c0_38] : memref<1x64xf32, #tpu.memory_space<vmem>>, vector<1x64xf32>
    %c1_i32_39 = arith.constant 1 : i32
    %99 = tpu.dynamic_rotate %91 by %c1_i32_39 dim 0 : vector<8x32xf32>, i32 -> vector<8x32xf32>
    %cst_40 = arith.constant 0.000000e+00 : f32
    %100 = vector.shape_cast %8 : vector<8x1xi1> to vector<8x1xi1>
    %101 = vector.broadcast %100 : vector<8x1xi1> to vector<8x32xi1>
    %102 = vector.broadcast %cst_40 : f32 to vector<8x32xf32>
    %103 = arith.select %101, %102, %99 : vector<8x32xi1>, vector<8x32xf32>
    %104 = tpu.concatenate %103, %89 in 0 : vector<8x32xf32>, vector<8x32xf32> -> vector<16x32xf32>
    %105 = tpu.concatenate %88, %90 in 0 : vector<8x32xf32>, vector<8x32xf32> -> vector<16x32xf32>
    %106 = tpu.concatenate %89, %91 in 0 : vector<8x32xf32>, vector<8x32xf32> -> vector<16x32xf32>
    %cst_41 = arith.constant dense<0.000000e+00> : vector<16x64xf32>
    %107 = tpu.matmul %104, %93, %cst_41 {dimension_numbers = #tpu.dot_dimension_numbers<[1], [0], [0], [1], [0, 0, 1, 1], [], []>} : vector<16x32xf32>, vector<32x64xf32>, vector<16x64xf32> -> vector<16x64xf32>
    %cst_42 = arith.constant dense<0.000000e+00> : vector<16x64xf32>
    %108 = tpu.matmul %105, %95, %cst_42 {dimension_numbers = #tpu.dot_dimension_numbers<[1], [0], [0], [1], [0, 0, 1, 1], [], []>} : vector<16x32xf32>, vector<32x64xf32>, vector<16x64xf32> -> vector<16x64xf32>
    %109 = arith.addf %107, %108 : vector<16x64xf32>
    %cst_43 = arith.constant dense<0.000000e+00> : vector<16x64xf32>
    %110 = tpu.matmul %106, %97, %cst_43 {dimension_numbers = #tpu.dot_dimension_numbers<[1], [0], [0], [1], [0, 0, 1, 1], [], []>} : vector<16x32xf32>, vector<32x64xf32>, vector<16x64xf32> -> vector<16x64xf32>
    %111 = arith.addf %109, %110 : vector<16x64xf32>
    %112 = vector.broadcast %98 : vector<1x64xf32> to vector<16x64xf32>
    %113 = arith.addf %111, %112 : vector<16x64xf32>
    %cst_44 = arith.constant 0.000000e+00 : f32
    %114 = vector.broadcast %cst_44 : f32 to vector<16x64xf32>
    %115 = arith.maximumf %113, %114 : vector<16x64xf32>
    %116 = vector.extract_strided_slice %115 {offsets = [0, 0], sizes = [8, 64], strides = [1, 1]} : vector<16x64xf32> to vector<8x64xf32>
    %117 = vector.extract_strided_slice %115 {offsets = [8, 0], sizes = [8, 64], strides = [1, 1]} : vector<16x64xf32> to vector<8x64xf32>
    %c0_45 = arith.constant 0 : index
    %c0_46 = arith.constant 0 : index
    %c0_47 = arith.constant 0 : index
    %118 = vector.load %arg8[%c0_45, %c0_46, %c0_47] : memref<3x64x128xf32, #tpu.memory_space<vmem>>, vector<1x64x128xf32>
    %119 = vector.shape_cast %118 : vector<1x64x128xf32> to vector<64x128xf32>
    %c1_48 = arith.constant 1 : index
    %c0_49 = arith.constant 0 : index
    %c0_50 = arith.constant 0 : index
    %120 = vector.load %arg8[%c1_48, %c0_49, %c0_50] : memref<3x64x128xf32, #tpu.memory_space<vmem>>, vector<1x64x128xf32>
    %121 = vector.shape_cast %120 : vector<1x64x128xf32> to vector<64x128xf32>
    %c2_51 = arith.constant 2 : index
    %c0_52 = arith.constant 0 : index
    %c0_53 = arith.constant 0 : index
    %122 = vector.load %arg8[%c2_51, %c0_52, %c0_53] : memref<3x64x128xf32, #tpu.memory_space<vmem>>, vector<1x64x128xf32>
    %123 = vector.shape_cast %122 : vector<1x64x128xf32> to vector<64x128xf32>
    %c0_54 = arith.constant 0 : index
    %c0_55 = arith.constant 0 : index
    %124 = vector.load %arg9[%c0_54, %c0_55] : memref<1x128xf32, #tpu.memory_space<vmem>>, vector<1x128xf32>
    %c1_i32_56 = arith.constant 1 : i32
    %125 = tpu.dynamic_rotate %117 by %c1_i32_56 dim 0 : vector<8x64xf32>, i32 -> vector<8x64xf32>
    %cst_57 = arith.constant 0.000000e+00 : f32
    %126 = vector.shape_cast %8 : vector<8x1xi1> to vector<8x1xi1>
    %127 = vector.broadcast %126 : vector<8x1xi1> to vector<8x64xi1>
    %128 = vector.broadcast %cst_57 : f32 to vector<8x64xf32>
    %129 = arith.select %127, %128, %125 : vector<8x64xi1>, vector<8x64xf32>
    %cst_58 = arith.constant dense<0.000000e+00> : vector<8x128xf32>
    %130 = tpu.matmul %129, %119, %cst_58 {dimension_numbers = #tpu.dot_dimension_numbers<[1], [0], [0], [1], [0, 0, 1, 1], [], []>} : vector<8x64xf32>, vector<64x128xf32>, vector<8x128xf32> -> vector<8x128xf32>
    %cst_59 = arith.constant dense<0.000000e+00> : vector<8x128xf32>
    %131 = tpu.matmul %116, %121, %cst_59 {dimension_numbers = #tpu.dot_dimension_numbers<[1], [0], [0], [1], [0, 0, 1, 1], [], []>} : vector<8x64xf32>, vector<64x128xf32>, vector<8x128xf32> -> vector<8x128xf32>
    %132 = arith.addf %130, %131 : vector<8x128xf32>
    %cst_60 = arith.constant dense<0.000000e+00> : vector<8x128xf32>
    %133 = tpu.matmul %117, %123, %cst_60 {dimension_numbers = #tpu.dot_dimension_numbers<[1], [0], [0], [1], [0, 0, 1, 1], [], []>} : vector<8x64xf32>, vector<64x128xf32>, vector<8x128xf32> -> vector<8x128xf32>
    %134 = arith.addf %132, %133 : vector<8x128xf32>
    %135 = vector.broadcast %124 : vector<1x128xf32> to vector<8x128xf32>
    %136 = arith.addf %134, %135 : vector<8x128xf32>
    %c0_61 = arith.constant 0 : index
    %c0_62 = arith.constant 0 : index
    %c0_63 = arith.constant 0 : index
    %137 = vector.load %arg10[%c0_61, %c0_62, %c0_63] : memref<3x128x64xf32, #tpu.memory_space<vmem>>, vector<1x128x64xf32>
    %138 = vector.shape_cast %137 : vector<1x128x64xf32> to vector<128x64xf32>
    %c1_64 = arith.constant 1 : index
    %c0_65 = arith.constant 0 : index
    %c0_66 = arith.constant 0 : index
    %139 = vector.load %arg10[%c1_64, %c0_65, %c0_66] : memref<3x128x64xf32, #tpu.memory_space<vmem>>, vector<1x128x64xf32>
    %140 = vector.shape_cast %139 : vector<1x128x64xf32> to vector<128x64xf32>
    %c2_67 = arith.constant 2 : index
    %c0_68 = arith.constant 0 : index
    %c0_69 = arith.constant 0 : index
    %141 = vector.load %arg10[%c2_67, %c0_68, %c0_69] : memref<3x128x64xf32, #tpu.memory_space<vmem>>, vector<1x128x64xf32>
    %142 = vector.shape_cast %141 : vector<1x128x64xf32> to vector<128x64xf32>
    %c0_70 = arith.constant 0 : index
    %c0_71 = arith.constant 0 : index
    %143 = vector.load %arg11[%c0_70, %c0_71] : memref<1x64xf32, #tpu.memory_space<vmem>>, vector<1x64xf32>
    %c7_i32_72 = arith.constant 7 : i32
    %144 = tpu.dynamic_rotate %136 by %c7_i32_72 dim 0 : vector<8x128xf32>, i32 -> vector<8x128xf32>
    %cst_73 = arith.constant 0.000000e+00 : f32
    %145 = vector.shape_cast %11 : vector<8x1xi1> to vector<8x1xi1>
    %146 = vector.broadcast %145 : vector<8x1xi1> to vector<8x128xi1>
    %147 = vector.broadcast %cst_73 : f32 to vector<8x128xf32>
    %148 = arith.select %146, %147, %144 : vector<8x128xi1>, vector<8x128xf32>
    %cst_74 = arith.constant dense<0.000000e+00> : vector<8x64xf32>
    %149 = tpu.matmul %136, %140, %cst_74 {dimension_numbers = #tpu.dot_dimension_numbers<[1], [0], [0], [1], [0, 0, 1, 1], [], []>} : vector<8x128xf32>, vector<128x64xf32>, vector<8x64xf32> -> vector<8x64xf32>
    %150 = vector.broadcast %143 : vector<1x64xf32> to vector<8x64xf32>
    %151 = arith.addf %149, %150 : vector<8x64xf32>
    %cst_75 = arith.constant dense<0.000000e+00> : vector<8x64xf32>
    %152 = tpu.matmul %148, %138, %cst_75 {dimension_numbers = #tpu.dot_dimension_numbers<[1], [0], [0], [1], [0, 0, 1, 1], [], []>} : vector<8x128xf32>, vector<128x64xf32>, vector<8x64xf32> -> vector<8x64xf32>
    %cst_76 = arith.constant dense<0.000000e+00> : vector<8x64xf32>
    %153 = tpu.matmul %136, %142, %cst_76 {dimension_numbers = #tpu.dot_dimension_numbers<[1], [0], [0], [1], [0, 0, 1, 1], [], []>} : vector<8x128xf32>, vector<128x64xf32>, vector<8x64xf32> -> vector<8x64xf32>
    %154 = arith.addf %152, %153 : vector<8x64xf32>
    %155 = vector.broadcast %143 : vector<1x64xf32> to vector<8x64xf32>
    %156 = arith.addf %154, %155 : vector<8x64xf32>
    %cst_77 = arith.constant 0.000000e+00 : f32
    %157 = vector.broadcast %cst_77 : f32 to vector<8x64xf32>
    %158 = arith.maximumf %151, %157 : vector<8x64xf32>
    %cst_78 = arith.constant 0.000000e+00 : f32
    %159 = vector.broadcast %cst_78 : f32 to vector<8x64xf32>
    %160 = arith.maximumf %156, %159 : vector<8x64xf32>
    %c0_79 = arith.constant 0 : index
    %c0_80 = arith.constant 0 : index
    %c0_81 = arith.constant 0 : index
    %161 = vector.load %arg12[%c0_79, %c0_80, %c0_81] : memref<3x64x32xf32, #tpu.memory_space<vmem>>, vector<1x64x32xf32>
    %162 = vector.shape_cast %161 : vector<1x64x32xf32> to vector<64x32xf32>
    %c1_82 = arith.constant 1 : index
    %c0_83 = arith.constant 0 : index
    %c0_84 = arith.constant 0 : index
    %163 = vector.load %arg12[%c1_82, %c0_83, %c0_84] : memref<3x64x32xf32, #tpu.memory_space<vmem>>, vector<1x64x32xf32>
    %164 = vector.shape_cast %163 : vector<1x64x32xf32> to vector<64x32xf32>
    %c2_85 = arith.constant 2 : index
    %c0_86 = arith.constant 0 : index
    %c0_87 = arith.constant 0 : index
    %165 = vector.load %arg12[%c2_85, %c0_86, %c0_87] : memref<3x64x32xf32, #tpu.memory_space<vmem>>, vector<1x64x32xf32>
    %166 = vector.shape_cast %165 : vector<1x64x32xf32> to vector<64x32xf32>
    %c0_88 = arith.constant 0 : index
    %c0_89 = arith.constant 0 : index
    %167 = vector.load %arg13[%c0_88, %c0_89] : memref<1x32xf32, #tpu.memory_space<vmem>>, vector<1x32xf32>
    %c7_i32_90 = arith.constant 7 : i32
    %168 = tpu.dynamic_rotate %158 by %c7_i32_90 dim 0 : vector<8x64xf32>, i32 -> vector<8x64xf32>
    %cst_91 = arith.constant 0.000000e+00 : f32
    %169 = vector.shape_cast %11 : vector<8x1xi1> to vector<8x1xi1>
    %170 = vector.broadcast %169 : vector<8x1xi1> to vector<8x64xi1>
    %171 = vector.broadcast %cst_91 : f32 to vector<8x64xf32>
    %172 = arith.select %170, %171, %168 : vector<8x64xi1>, vector<8x64xf32>
    %173 = tpu.concatenate %158, %160 in 0 : vector<8x64xf32>, vector<8x64xf32> -> vector<16x64xf32>
    %174 = tpu.concatenate %160, %172 in 0 : vector<8x64xf32>, vector<8x64xf32> -> vector<16x64xf32>
    %cst_92 = arith.constant dense<0.000000e+00> : vector<16x32xf32>
    %175 = tpu.matmul %173, %164, %cst_92 {dimension_numbers = #tpu.dot_dimension_numbers<[1], [0], [0], [1], [0, 0, 1, 1], [], []>} : vector<16x64xf32>, vector<64x32xf32>, vector<16x32xf32> -> vector<16x32xf32>
    %176 = vector.broadcast %167 : vector<1x32xf32> to vector<16x32xf32>
    %177 = arith.addf %175, %176 : vector<16x32xf32>
    %cst_93 = arith.constant dense<0.000000e+00> : vector<16x32xf32>
    %178 = tpu.matmul %174, %162, %cst_93 {dimension_numbers = #tpu.dot_dimension_numbers<[1], [0], [0], [1], [0, 0, 1, 1], [], []>} : vector<16x64xf32>, vector<64x32xf32>, vector<16x32xf32> -> vector<16x32xf32>
    %cst_94 = arith.constant dense<0.000000e+00> : vector<16x32xf32>
    %179 = tpu.matmul %173, %166, %cst_94 {dimension_numbers = #tpu.dot_dimension_numbers<[1], [0], [0], [1], [0, 0, 1, 1], [], []>} : vector<16x64xf32>, vector<64x32xf32>, vector<16x32xf32> -> vector<16x32xf32>
    %180 = arith.addf %178, %179 : vector<16x32xf32>
    %181 = vector.broadcast %167 : vector<1x32xf32> to vector<16x32xf32>
    %182 = arith.addf %180, %181 : vector<16x32xf32>
    %cst_95 = arith.constant 0.000000e+00 : f32
    %183 = vector.broadcast %cst_95 : f32 to vector<16x32xf32>
    %184 = arith.maximumf %177, %183 : vector<16x32xf32>
    %cst_96 = arith.constant 0.000000e+00 : f32
    %185 = vector.broadcast %cst_96 : f32 to vector<16x32xf32>
    %186 = arith.maximumf %182, %185 : vector<16x32xf32>
    %187 = vector.extract_strided_slice %184 {offsets = [0, 0], sizes = [8, 32], strides = [1, 1]} : vector<16x32xf32> to vector<8x32xf32>
    %188 = vector.extract_strided_slice %186 {offsets = [0, 0], sizes = [8, 32], strides = [1, 1]} : vector<16x32xf32> to vector<8x32xf32>
    %189 = vector.extract_strided_slice %184 {offsets = [8, 0], sizes = [8, 32], strides = [1, 1]} : vector<16x32xf32> to vector<8x32xf32>
    %190 = vector.extract_strided_slice %186 {offsets = [8, 0], sizes = [8, 32], strides = [1, 1]} : vector<16x32xf32> to vector<8x32xf32>
    %c0_97 = arith.constant 0 : index
    %c0_98 = arith.constant 0 : index
    %c0_99 = arith.constant 0 : index
    %191 = vector.load %arg14[%c0_97, %c0_98, %c0_99] : memref<3x32x16xf32, #tpu.memory_space<vmem>>, vector<1x32x16xf32>
    %192 = vector.shape_cast %191 : vector<1x32x16xf32> to vector<32x16xf32>
    %c1_100 = arith.constant 1 : index
    %c0_101 = arith.constant 0 : index
    %c0_102 = arith.constant 0 : index
    %193 = vector.load %arg14[%c1_100, %c0_101, %c0_102] : memref<3x32x16xf32, #tpu.memory_space<vmem>>, vector<1x32x16xf32>
    %194 = vector.shape_cast %193 : vector<1x32x16xf32> to vector<32x16xf32>
    %c2_103 = arith.constant 2 : index
    %c0_104 = arith.constant 0 : index
    %c0_105 = arith.constant 0 : index
    %195 = vector.load %arg14[%c2_103, %c0_104, %c0_105] : memref<3x32x16xf32, #tpu.memory_space<vmem>>, vector<1x32x16xf32>
    %196 = vector.shape_cast %195 : vector<1x32x16xf32> to vector<32x16xf32>
    %c0_106 = arith.constant 0 : index
    %c0_107 = arith.constant 0 : index
    %197 = vector.load %arg15[%c0_106, %c0_107] : memref<1x16xf32, #tpu.memory_space<vmem>>, vector<1x16xf32>
    %c7_i32_108 = arith.constant 7 : i32
    %198 = tpu.dynamic_rotate %187 by %c7_i32_108 dim 0 : vector<8x32xf32>, i32 -> vector<8x32xf32>
    %cst_109 = arith.constant 0.000000e+00 : f32
    %199 = vector.shape_cast %11 : vector<8x1xi1> to vector<8x1xi1>
    %200 = vector.broadcast %199 : vector<8x1xi1> to vector<8x32xi1>
    %201 = vector.broadcast %cst_109 : f32 to vector<8x32xf32>
    %202 = arith.select %200, %201, %198 : vector<8x32xi1>, vector<8x32xf32>
    %203 = tpu.concatenate %187, %188, %189, %190 in 0 : vector<8x32xf32>, vector<8x32xf32>, vector<8x32xf32>, vector<8x32xf32> -> vector<32x32xf32>
    %204 = tpu.concatenate %188, %189, %190, %202 in 0 : vector<8x32xf32>, vector<8x32xf32>, vector<8x32xf32>, vector<8x32xf32> -> vector<32x32xf32>
    %cst_110 = arith.constant dense<0.000000e+00> : vector<32x16xf32>
    %205 = tpu.matmul %203, %194, %cst_110 {dimension_numbers = #tpu.dot_dimension_numbers<[1], [0], [0], [1], [0, 0, 1, 1], [], []>} : vector<32x32xf32>, vector<32x16xf32>, vector<32x16xf32> -> vector<32x16xf32>
    %206 = vector.broadcast %197 : vector<1x16xf32> to vector<32x16xf32>
    %207 = arith.addf %205, %206 : vector<32x16xf32>
    %cst_111 = arith.constant dense<0.000000e+00> : vector<32x16xf32>
    %208 = tpu.matmul %204, %192, %cst_111 {dimension_numbers = #tpu.dot_dimension_numbers<[1], [0], [0], [1], [0, 0, 1, 1], [], []>} : vector<32x32xf32>, vector<32x16xf32>, vector<32x16xf32> -> vector<32x16xf32>
    %cst_112 = arith.constant dense<0.000000e+00> : vector<32x16xf32>
    %209 = tpu.matmul %203, %196, %cst_112 {dimension_numbers = #tpu.dot_dimension_numbers<[1], [0], [0], [1], [0, 0, 1, 1], [], []>} : vector<32x32xf32>, vector<32x16xf32>, vector<32x16xf32> -> vector<32x16xf32>
    %210 = arith.addf %208, %209 : vector<32x16xf32>
    %211 = vector.broadcast %197 : vector<1x16xf32> to vector<32x16xf32>
    %212 = arith.addf %210, %211 : vector<32x16xf32>
    %cst_113 = arith.constant 0.000000e+00 : f32
    %213 = vector.broadcast %cst_113 : f32 to vector<32x16xf32>
    %214 = arith.maximumf %207, %213 : vector<32x16xf32>
    %cst_114 = arith.constant 0.000000e+00 : f32
    %215 = vector.broadcast %cst_114 : f32 to vector<32x16xf32>
    %216 = arith.maximumf %212, %215 : vector<32x16xf32>
    %217 = vector.extract_strided_slice %214 {offsets = [0, 0], sizes = [8, 16], strides = [1, 1]} : vector<32x16xf32> to vector<8x16xf32>
    %218 = vector.extract_strided_slice %216 {offsets = [0, 0], sizes = [8, 16], strides = [1, 1]} : vector<32x16xf32> to vector<8x16xf32>
    %219 = vector.extract_strided_slice %214 {offsets = [8, 0], sizes = [8, 16], strides = [1, 1]} : vector<32x16xf32> to vector<8x16xf32>
    %220 = vector.extract_strided_slice %216 {offsets = [8, 0], sizes = [8, 16], strides = [1, 1]} : vector<32x16xf32> to vector<8x16xf32>
    %221 = vector.extract_strided_slice %214 {offsets = [16, 0], sizes = [8, 16], strides = [1, 1]} : vector<32x16xf32> to vector<8x16xf32>
    %222 = vector.extract_strided_slice %216 {offsets = [16, 0], sizes = [8, 16], strides = [1, 1]} : vector<32x16xf32> to vector<8x16xf32>
    %223 = vector.extract_strided_slice %214 {offsets = [24, 0], sizes = [8, 16], strides = [1, 1]} : vector<32x16xf32> to vector<8x16xf32>
    %224 = vector.extract_strided_slice %216 {offsets = [24, 0], sizes = [8, 16], strides = [1, 1]} : vector<32x16xf32> to vector<8x16xf32>
    %c0_115 = arith.constant 0 : index
    %c0_116 = arith.constant 0 : index
    %c0_117 = arith.constant 0 : index
    %225 = vector.load %arg16[%c0_115, %c0_116, %c0_117] : memref<3x1x16xf32, #tpu.memory_space<vmem>>, vector<1x1x16xf32>
    %226 = vector.shape_cast %225 : vector<1x1x16xf32> to vector<1x16xf32>
    %c1_118 = arith.constant 1 : index
    %c0_119 = arith.constant 0 : index
    %c0_120 = arith.constant 0 : index
    %227 = vector.load %arg16[%c1_118, %c0_119, %c0_120] : memref<3x1x16xf32, #tpu.memory_space<vmem>>, vector<1x1x16xf32>
    %228 = vector.shape_cast %227 : vector<1x1x16xf32> to vector<1x16xf32>
    %c2_121 = arith.constant 2 : index
    %c0_122 = arith.constant 0 : index
    %c0_123 = arith.constant 0 : index
    %229 = vector.load %arg16[%c2_121, %c0_122, %c0_123] : memref<3x1x16xf32, #tpu.memory_space<vmem>>, vector<1x1x16xf32>
    %230 = vector.shape_cast %229 : vector<1x1x16xf32> to vector<1x16xf32>
    %c0_124 = arith.constant 0 : index
    %c0_125 = arith.constant 0 : index
    %231 = vector.load %arg17[%c0_124, %c0_125] : memref<1x1xf32, #tpu.memory_space<vmem>>, vector<1x1xf32>
    %232 = tpu.iota {dimensions = array<i32: 1>} : vector<1x16xi32>
    %cst_126 = arith.constant 0.000000e+00 : f32
    %233 = vector.broadcast %cst_126 : f32 to vector<8x16xf32>
    %234 = vector.broadcast %228 : vector<1x16xf32> to vector<8x16xf32>
    %235 = arith.mulf %217, %234 : vector<8x16xf32>
    %cst_127 = arith.constant dense<0.000000e+00> : vector<8xf32>
    %236 = vector.multi_reduction <add>, %235, %cst_127 [1] : vector<8x16xf32> to vector<8xf32>
    %237 = vector.shape_cast %236 : vector<8xf32> to vector<8x1xf32>
    %238 = vector.broadcast %231 : vector<1x1xf32> to vector<8x1xf32>
    %239 = arith.addf %237, %238 : vector<8x1xf32>
    %240 = vector.broadcast %226 : vector<1x16xf32> to vector<8x16xf32>
    %241 = arith.mulf %218, %240 : vector<8x16xf32>
    %242 = vector.broadcast %230 : vector<1x16xf32> to vector<8x16xf32>
    %243 = arith.mulf %217, %242 : vector<8x16xf32>
    %244 = arith.addf %241, %243 : vector<8x16xf32>
    %cst_128 = arith.constant dense<0.000000e+00> : vector<8xf32>
    %245 = vector.multi_reduction <add>, %244, %cst_128 [1] : vector<8x16xf32> to vector<8xf32>
    %246 = vector.shape_cast %245 : vector<8xf32> to vector<8x1xf32>
    %247 = vector.broadcast %231 : vector<1x1xf32> to vector<8x1xf32>
    %248 = arith.addf %246, %247 : vector<8x1xf32>
    %c0_i32_129 = arith.constant 0 : i32
    %249 = vector.broadcast %c0_i32_129 : i32 to vector<1x16xi32>
    %250 = arith.cmpi eq, %232, %249 : vector<1x16xi32>
    %cst_130 = arith.constant 0.000000e+00 : f32
    %251 = vector.shape_cast %250 : vector<1x16xi1> to vector<1x16xi1>
    %252 = vector.broadcast %251 : vector<1x16xi1> to vector<8x16xi1>
    %253 = vector.shape_cast %239 : vector<8x1xf32> to vector<8x1xf32>
    %254 = vector.broadcast %253 : vector<8x1xf32> to vector<8x16xf32>
    %255 = vector.broadcast %cst_130 : f32 to vector<8x16xf32>
    %256 = arith.select %252, %254, %255 : vector<8x16xi1>, vector<8x16xf32>
    %257 = arith.addf %233, %256 : vector<8x16xf32>
    %c1_i32_131 = arith.constant 1 : i32
    %258 = vector.broadcast %c1_i32_131 : i32 to vector<1x16xi32>
    %259 = arith.cmpi eq, %232, %258 : vector<1x16xi32>
    %cst_132 = arith.constant 0.000000e+00 : f32
    %260 = vector.shape_cast %259 : vector<1x16xi1> to vector<1x16xi1>
    %261 = vector.broadcast %260 : vector<1x16xi1> to vector<8x16xi1>
    %262 = vector.shape_cast %248 : vector<8x1xf32> to vector<8x1xf32>
    %263 = vector.broadcast %262 : vector<8x1xf32> to vector<8x16xf32>
    %264 = vector.broadcast %cst_132 : f32 to vector<8x16xf32>
    %265 = arith.select %261, %263, %264 : vector<8x16xi1>, vector<8x16xf32>
    %266 = arith.addf %257, %265 : vector<8x16xf32>
    %267 = vector.broadcast %228 : vector<1x16xf32> to vector<8x16xf32>
    %268 = arith.mulf %218, %267 : vector<8x16xf32>
    %cst_133 = arith.constant dense<0.000000e+00> : vector<8xf32>
    %269 = vector.multi_reduction <add>, %268, %cst_133 [1] : vector<8x16xf32> to vector<8xf32>
    %270 = vector.shape_cast %269 : vector<8xf32> to vector<8x1xf32>
    %271 = vector.broadcast %231 : vector<1x1xf32> to vector<8x1xf32>
    %272 = arith.addf %270, %271 : vector<8x1xf32>
    %273 = vector.broadcast %226 : vector<1x16xf32> to vector<8x16xf32>
    %274 = arith.mulf %219, %273 : vector<8x16xf32>
    %275 = vector.broadcast %230 : vector<1x16xf32> to vector<8x16xf32>
    %276 = arith.mulf %218, %275 : vector<8x16xf32>
    %277 = arith.addf %274, %276 : vector<8x16xf32>
    %cst_134 = arith.constant dense<0.000000e+00> : vector<8xf32>
    %278 = vector.multi_reduction <add>, %277, %cst_134 [1] : vector<8x16xf32> to vector<8xf32>
    %279 = vector.shape_cast %278 : vector<8xf32> to vector<8x1xf32>
    %280 = vector.broadcast %231 : vector<1x1xf32> to vector<8x1xf32>
    %281 = arith.addf %279, %280 : vector<8x1xf32>
    %c2_i32 = arith.constant 2 : i32
    %282 = vector.broadcast %c2_i32 : i32 to vector<1x16xi32>
    %283 = arith.cmpi eq, %232, %282 : vector<1x16xi32>
    %cst_135 = arith.constant 0.000000e+00 : f32
    %284 = vector.shape_cast %283 : vector<1x16xi1> to vector<1x16xi1>
    %285 = vector.broadcast %284 : vector<1x16xi1> to vector<8x16xi1>
    %286 = vector.shape_cast %272 : vector<8x1xf32> to vector<8x1xf32>
    %287 = vector.broadcast %286 : vector<8x1xf32> to vector<8x16xf32>
    %288 = vector.broadcast %cst_135 : f32 to vector<8x16xf32>
    %289 = arith.select %285, %287, %288 : vector<8x16xi1>, vector<8x16xf32>
    %290 = arith.addf %266, %289 : vector<8x16xf32>
    %c3_i32_136 = arith.constant 3 : i32
    %291 = vector.broadcast %c3_i32_136 : i32 to vector<1x16xi32>
    %292 = arith.cmpi eq, %232, %291 : vector<1x16xi32>
    %cst_137 = arith.constant 0.000000e+00 : f32
    %293 = vector.shape_cast %292 : vector<1x16xi1> to vector<1x16xi1>
    %294 = vector.broadcast %293 : vector<1x16xi1> to vector<8x16xi1>
    %295 = vector.shape_cast %281 : vector<8x1xf32> to vector<8x1xf32>
    %296 = vector.broadcast %295 : vector<8x1xf32> to vector<8x16xf32>
    %297 = vector.broadcast %cst_137 : f32 to vector<8x16xf32>
    %298 = arith.select %294, %296, %297 : vector<8x16xi1>, vector<8x16xf32>
    %299 = arith.addf %290, %298 : vector<8x16xf32>
    %300 = vector.broadcast %228 : vector<1x16xf32> to vector<8x16xf32>
    %301 = arith.mulf %219, %300 : vector<8x16xf32>
    %cst_138 = arith.constant dense<0.000000e+00> : vector<8xf32>
    %302 = vector.multi_reduction <add>, %301, %cst_138 [1] : vector<8x16xf32> to vector<8xf32>
    %303 = vector.shape_cast %302 : vector<8xf32> to vector<8x1xf32>
    %304 = vector.broadcast %231 : vector<1x1xf32> to vector<8x1xf32>
    %305 = arith.addf %303, %304 : vector<8x1xf32>
    %306 = vector.broadcast %226 : vector<1x16xf32> to vector<8x16xf32>
    %307 = arith.mulf %220, %306 : vector<8x16xf32>
    %308 = vector.broadcast %230 : vector<1x16xf32> to vector<8x16xf32>
    %309 = arith.mulf %219, %308 : vector<8x16xf32>
    %310 = arith.addf %307, %309 : vector<8x16xf32>
    %cst_139 = arith.constant dense<0.000000e+00> : vector<8xf32>
    %311 = vector.multi_reduction <add>, %310, %cst_139 [1] : vector<8x16xf32> to vector<8xf32>
    %312 = vector.shape_cast %311 : vector<8xf32> to vector<8x1xf32>
    %313 = vector.broadcast %231 : vector<1x1xf32> to vector<8x1xf32>
    %314 = arith.addf %312, %313 : vector<8x1xf32>
    %c4_i32_140 = arith.constant 4 : i32
    %315 = vector.broadcast %c4_i32_140 : i32 to vector<1x16xi32>
    %316 = arith.cmpi eq, %232, %315 : vector<1x16xi32>
    %cst_141 = arith.constant 0.000000e+00 : f32
    %317 = vector.shape_cast %316 : vector<1x16xi1> to vector<1x16xi1>
    %318 = vector.broadcast %317 : vector<1x16xi1> to vector<8x16xi1>
    %319 = vector.shape_cast %305 : vector<8x1xf32> to vector<8x1xf32>
    %320 = vector.broadcast %319 : vector<8x1xf32> to vector<8x16xf32>
    %321 = vector.broadcast %cst_141 : f32 to vector<8x16xf32>
    %322 = arith.select %318, %320, %321 : vector<8x16xi1>, vector<8x16xf32>
    %323 = arith.addf %299, %322 : vector<8x16xf32>
    %c5_i32 = arith.constant 5 : i32
    %324 = vector.broadcast %c5_i32 : i32 to vector<1x16xi32>
    %325 = arith.cmpi eq, %232, %324 : vector<1x16xi32>
    %cst_142 = arith.constant 0.000000e+00 : f32
    %326 = vector.shape_cast %325 : vector<1x16xi1> to vector<1x16xi1>
    %327 = vector.broadcast %326 : vector<1x16xi1> to vector<8x16xi1>
    %328 = vector.shape_cast %314 : vector<8x1xf32> to vector<8x1xf32>
    %329 = vector.broadcast %328 : vector<8x1xf32> to vector<8x16xf32>
    %330 = vector.broadcast %cst_142 : f32 to vector<8x16xf32>
    %331 = arith.select %327, %329, %330 : vector<8x16xi1>, vector<8x16xf32>
    %332 = arith.addf %323, %331 : vector<8x16xf32>
    %333 = vector.broadcast %228 : vector<1x16xf32> to vector<8x16xf32>
    %334 = arith.mulf %220, %333 : vector<8x16xf32>
    %cst_143 = arith.constant dense<0.000000e+00> : vector<8xf32>
    %335 = vector.multi_reduction <add>, %334, %cst_143 [1] : vector<8x16xf32> to vector<8xf32>
    %336 = vector.shape_cast %335 : vector<8xf32> to vector<8x1xf32>
    %337 = vector.broadcast %231 : vector<1x1xf32> to vector<8x1xf32>
    %338 = arith.addf %336, %337 : vector<8x1xf32>
    %339 = vector.broadcast %226 : vector<1x16xf32> to vector<8x16xf32>
    %340 = arith.mulf %221, %339 : vector<8x16xf32>
    %341 = vector.broadcast %230 : vector<1x16xf32> to vector<8x16xf32>
    %342 = arith.mulf %220, %341 : vector<8x16xf32>
    %343 = arith.addf %340, %342 : vector<8x16xf32>
    %cst_144 = arith.constant dense<0.000000e+00> : vector<8xf32>
    %344 = vector.multi_reduction <add>, %343, %cst_144 [1] : vector<8x16xf32> to vector<8xf32>
    %345 = vector.shape_cast %344 : vector<8xf32> to vector<8x1xf32>
    %346 = vector.broadcast %231 : vector<1x1xf32> to vector<8x1xf32>
    %347 = arith.addf %345, %346 : vector<8x1xf32>
    %c6_i32 = arith.constant 6 : i32
    %348 = vector.broadcast %c6_i32 : i32 to vector<1x16xi32>
    %349 = arith.cmpi eq, %232, %348 : vector<1x16xi32>
    %cst_145 = arith.constant 0.000000e+00 : f32
    %350 = vector.shape_cast %349 : vector<1x16xi1> to vector<1x16xi1>
    %351 = vector.broadcast %350 : vector<1x16xi1> to vector<8x16xi1>
    %352 = vector.shape_cast %338 : vector<8x1xf32> to vector<8x1xf32>
    %353 = vector.broadcast %352 : vector<8x1xf32> to vector<8x16xf32>
    %354 = vector.broadcast %cst_145 : f32 to vector<8x16xf32>
    %355 = arith.select %351, %353, %354 : vector<8x16xi1>, vector<8x16xf32>
    %356 = arith.addf %332, %355 : vector<8x16xf32>
    %c7_i32_146 = arith.constant 7 : i32
    %357 = vector.broadcast %c7_i32_146 : i32 to vector<1x16xi32>
    %358 = arith.cmpi eq, %232, %357 : vector<1x16xi32>
    %cst_147 = arith.constant 0.000000e+00 : f32
    %359 = vector.shape_cast %358 : vector<1x16xi1> to vector<1x16xi1>
    %360 = vector.broadcast %359 : vector<1x16xi1> to vector<8x16xi1>
    %361 = vector.shape_cast %347 : vector<8x1xf32> to vector<8x1xf32>
    %362 = vector.broadcast %361 : vector<8x1xf32> to vector<8x16xf32>
    %363 = vector.broadcast %cst_147 : f32 to vector<8x16xf32>
    %364 = arith.select %360, %362, %363 : vector<8x16xi1>, vector<8x16xf32>
    %365 = arith.addf %356, %364 : vector<8x16xf32>
    %366 = vector.broadcast %228 : vector<1x16xf32> to vector<8x16xf32>
    %367 = arith.mulf %221, %366 : vector<8x16xf32>
    %cst_148 = arith.constant dense<0.000000e+00> : vector<8xf32>
    %368 = vector.multi_reduction <add>, %367, %cst_148 [1] : vector<8x16xf32> to vector<8xf32>
    %369 = vector.shape_cast %368 : vector<8xf32> to vector<8x1xf32>
    %370 = vector.broadcast %231 : vector<1x1xf32> to vector<8x1xf32>
    %371 = arith.addf %369, %370 : vector<8x1xf32>
    %372 = vector.broadcast %226 : vector<1x16xf32> to vector<8x16xf32>
    %373 = arith.mulf %222, %372 : vector<8x16xf32>
    %374 = vector.broadcast %230 : vector<1x16xf32> to vector<8x16xf32>
    %375 = arith.mulf %221, %374 : vector<8x16xf32>
    %376 = arith.addf %373, %375 : vector<8x16xf32>
    %cst_149 = arith.constant dense<0.000000e+00> : vector<8xf32>
    %377 = vector.multi_reduction <add>, %376, %cst_149 [1] : vector<8x16xf32> to vector<8xf32>
    %378 = vector.shape_cast %377 : vector<8xf32> to vector<8x1xf32>
    %379 = vector.broadcast %231 : vector<1x1xf32> to vector<8x1xf32>
    %380 = arith.addf %378, %379 : vector<8x1xf32>
    %c8_i32 = arith.constant 8 : i32
    %381 = vector.broadcast %c8_i32 : i32 to vector<1x16xi32>
    %382 = arith.cmpi eq, %232, %381 : vector<1x16xi32>
    %cst_150 = arith.constant 0.000000e+00 : f32
    %383 = vector.shape_cast %382 : vector<1x16xi1> to vector<1x16xi1>
    %384 = vector.broadcast %383 : vector<1x16xi1> to vector<8x16xi1>
    %385 = vector.shape_cast %371 : vector<8x1xf32> to vector<8x1xf32>
    %386 = vector.broadcast %385 : vector<8x1xf32> to vector<8x16xf32>
    %387 = vector.broadcast %cst_150 : f32 to vector<8x16xf32>
    %388 = arith.select %384, %386, %387 : vector<8x16xi1>, vector<8x16xf32>
    %389 = arith.addf %365, %388 : vector<8x16xf32>
    %c9_i32 = arith.constant 9 : i32
    %390 = vector.broadcast %c9_i32 : i32 to vector<1x16xi32>
    %391 = arith.cmpi eq, %232, %390 : vector<1x16xi32>
    %cst_151 = arith.constant 0.000000e+00 : f32
    %392 = vector.shape_cast %391 : vector<1x16xi1> to vector<1x16xi1>
    %393 = vector.broadcast %392 : vector<1x16xi1> to vector<8x16xi1>
    %394 = vector.shape_cast %380 : vector<8x1xf32> to vector<8x1xf32>
    %395 = vector.broadcast %394 : vector<8x1xf32> to vector<8x16xf32>
    %396 = vector.broadcast %cst_151 : f32 to vector<8x16xf32>
    %397 = arith.select %393, %395, %396 : vector<8x16xi1>, vector<8x16xf32>
    %398 = arith.addf %389, %397 : vector<8x16xf32>
    %399 = vector.broadcast %228 : vector<1x16xf32> to vector<8x16xf32>
    %400 = arith.mulf %222, %399 : vector<8x16xf32>
    %cst_152 = arith.constant dense<0.000000e+00> : vector<8xf32>
    %401 = vector.multi_reduction <add>, %400, %cst_152 [1] : vector<8x16xf32> to vector<8xf32>
    %402 = vector.shape_cast %401 : vector<8xf32> to vector<8x1xf32>
    %403 = vector.broadcast %231 : vector<1x1xf32> to vector<8x1xf32>
    %404 = arith.addf %402, %403 : vector<8x1xf32>
    %405 = vector.broadcast %226 : vector<1x16xf32> to vector<8x16xf32>
    %406 = arith.mulf %223, %405 : vector<8x16xf32>
    %407 = vector.broadcast %230 : vector<1x16xf32> to vector<8x16xf32>
    %408 = arith.mulf %222, %407 : vector<8x16xf32>
    %409 = arith.addf %406, %408 : vector<8x16xf32>
    %cst_153 = arith.constant dense<0.000000e+00> : vector<8xf32>
    %410 = vector.multi_reduction <add>, %409, %cst_153 [1] : vector<8x16xf32> to vector<8xf32>
    %411 = vector.shape_cast %410 : vector<8xf32> to vector<8x1xf32>
    %412 = vector.broadcast %231 : vector<1x1xf32> to vector<8x1xf32>
    %413 = arith.addf %411, %412 : vector<8x1xf32>
    %c10_i32 = arith.constant 10 : i32
    %414 = vector.broadcast %c10_i32 : i32 to vector<1x16xi32>
    %415 = arith.cmpi eq, %232, %414 : vector<1x16xi32>
    %cst_154 = arith.constant 0.000000e+00 : f32
    %416 = vector.shape_cast %415 : vector<1x16xi1> to vector<1x16xi1>
    %417 = vector.broadcast %416 : vector<1x16xi1> to vector<8x16xi1>
    %418 = vector.shape_cast %404 : vector<8x1xf32> to vector<8x1xf32>
    %419 = vector.broadcast %418 : vector<8x1xf32> to vector<8x16xf32>
    %420 = vector.broadcast %cst_154 : f32 to vector<8x16xf32>
    %421 = arith.select %417, %419, %420 : vector<8x16xi1>, vector<8x16xf32>
    %422 = arith.addf %398, %421 : vector<8x16xf32>
    %c11_i32 = arith.constant 11 : i32
    %423 = vector.broadcast %c11_i32 : i32 to vector<1x16xi32>
    %424 = arith.cmpi eq, %232, %423 : vector<1x16xi32>
    %cst_155 = arith.constant 0.000000e+00 : f32
    %425 = vector.shape_cast %424 : vector<1x16xi1> to vector<1x16xi1>
    %426 = vector.broadcast %425 : vector<1x16xi1> to vector<8x16xi1>
    %427 = vector.shape_cast %413 : vector<8x1xf32> to vector<8x1xf32>
    %428 = vector.broadcast %427 : vector<8x1xf32> to vector<8x16xf32>
    %429 = vector.broadcast %cst_155 : f32 to vector<8x16xf32>
    %430 = arith.select %426, %428, %429 : vector<8x16xi1>, vector<8x16xf32>
    %431 = arith.addf %422, %430 : vector<8x16xf32>
    %432 = vector.broadcast %228 : vector<1x16xf32> to vector<8x16xf32>
    %433 = arith.mulf %223, %432 : vector<8x16xf32>
    %cst_156 = arith.constant dense<0.000000e+00> : vector<8xf32>
    %434 = vector.multi_reduction <add>, %433, %cst_156 [1] : vector<8x16xf32> to vector<8xf32>
    %435 = vector.shape_cast %434 : vector<8xf32> to vector<8x1xf32>
    %436 = vector.broadcast %231 : vector<1x1xf32> to vector<8x1xf32>
    %437 = arith.addf %435, %436 : vector<8x1xf32>
    %438 = vector.broadcast %226 : vector<1x16xf32> to vector<8x16xf32>
    %439 = arith.mulf %224, %438 : vector<8x16xf32>
    %440 = vector.broadcast %230 : vector<1x16xf32> to vector<8x16xf32>
    %441 = arith.mulf %223, %440 : vector<8x16xf32>
    %442 = arith.addf %439, %441 : vector<8x16xf32>
    %cst_157 = arith.constant dense<0.000000e+00> : vector<8xf32>
    %443 = vector.multi_reduction <add>, %442, %cst_157 [1] : vector<8x16xf32> to vector<8xf32>
    %444 = vector.shape_cast %443 : vector<8xf32> to vector<8x1xf32>
    %445 = vector.broadcast %231 : vector<1x1xf32> to vector<8x1xf32>
    %446 = arith.addf %444, %445 : vector<8x1xf32>
    %c12_i32 = arith.constant 12 : i32
    %447 = vector.broadcast %c12_i32 : i32 to vector<1x16xi32>
    %448 = arith.cmpi eq, %232, %447 : vector<1x16xi32>
    %cst_158 = arith.constant 0.000000e+00 : f32
    %449 = vector.shape_cast %448 : vector<1x16xi1> to vector<1x16xi1>
    %450 = vector.broadcast %449 : vector<1x16xi1> to vector<8x16xi1>
    %451 = vector.shape_cast %437 : vector<8x1xf32> to vector<8x1xf32>
    %452 = vector.broadcast %451 : vector<8x1xf32> to vector<8x16xf32>
    %453 = vector.broadcast %cst_158 : f32 to vector<8x16xf32>
    %454 = arith.select %450, %452, %453 : vector<8x16xi1>, vector<8x16xf32>
    %455 = arith.addf %431, %454 : vector<8x16xf32>
    %c13_i32 = arith.constant 13 : i32
    %456 = vector.broadcast %c13_i32 : i32 to vector<1x16xi32>
    %457 = arith.cmpi eq, %232, %456 : vector<1x16xi32>
    %cst_159 = arith.constant 0.000000e+00 : f32
    %458 = vector.shape_cast %457 : vector<1x16xi1> to vector<1x16xi1>
    %459 = vector.broadcast %458 : vector<1x16xi1> to vector<8x16xi1>
    %460 = vector.shape_cast %446 : vector<8x1xf32> to vector<8x1xf32>
    %461 = vector.broadcast %460 : vector<8x1xf32> to vector<8x16xf32>
    %462 = vector.broadcast %cst_159 : f32 to vector<8x16xf32>
    %463 = arith.select %459, %461, %462 : vector<8x16xi1>, vector<8x16xf32>
    %464 = arith.addf %455, %463 : vector<8x16xf32>
    %c7_i32_160 = arith.constant 7 : i32
    %465 = tpu.dynamic_rotate %217 by %c7_i32_160 dim 0 : vector<8x16xf32>, i32 -> vector<8x16xf32>
    %cst_161 = arith.constant 0.000000e+00 : f32
    %466 = vector.shape_cast %11 : vector<8x1xi1> to vector<8x1xi1>
    %467 = vector.broadcast %466 : vector<8x1xi1> to vector<8x16xi1>
    %468 = vector.broadcast %cst_161 : f32 to vector<8x16xf32>
    %469 = arith.select %467, %468, %465 : vector<8x16xi1>, vector<8x16xf32>
    %470 = vector.broadcast %228 : vector<1x16xf32> to vector<8x16xf32>
    %471 = arith.mulf %224, %470 : vector<8x16xf32>
    %cst_162 = arith.constant dense<0.000000e+00> : vector<8xf32>
    %472 = vector.multi_reduction <add>, %471, %cst_162 [1] : vector<8x16xf32> to vector<8xf32>
    %473 = vector.shape_cast %472 : vector<8xf32> to vector<8x1xf32>
    %474 = vector.broadcast %231 : vector<1x1xf32> to vector<8x1xf32>
    %475 = arith.addf %473, %474 : vector<8x1xf32>
    %476 = vector.broadcast %226 : vector<1x16xf32> to vector<8x16xf32>
    %477 = arith.mulf %469, %476 : vector<8x16xf32>
    %478 = vector.broadcast %230 : vector<1x16xf32> to vector<8x16xf32>
    %479 = arith.mulf %224, %478 : vector<8x16xf32>
    %480 = arith.addf %477, %479 : vector<8x16xf32>
    %cst_163 = arith.constant dense<0.000000e+00> : vector<8xf32>
    %481 = vector.multi_reduction <add>, %480, %cst_163 [1] : vector<8x16xf32> to vector<8xf32>
    %482 = vector.shape_cast %481 : vector<8xf32> to vector<8x1xf32>
    %483 = vector.broadcast %231 : vector<1x1xf32> to vector<8x1xf32>
    %484 = arith.addf %482, %483 : vector<8x1xf32>
    %c14_i32 = arith.constant 14 : i32
    %485 = vector.broadcast %c14_i32 : i32 to vector<1x16xi32>
    %486 = arith.cmpi eq, %232, %485 : vector<1x16xi32>
    %cst_164 = arith.constant 0.000000e+00 : f32
    %487 = vector.shape_cast %486 : vector<1x16xi1> to vector<1x16xi1>
    %488 = vector.broadcast %487 : vector<1x16xi1> to vector<8x16xi1>
    %489 = vector.shape_cast %475 : vector<8x1xf32> to vector<8x1xf32>
    %490 = vector.broadcast %489 : vector<8x1xf32> to vector<8x16xf32>
    %491 = vector.broadcast %cst_164 : f32 to vector<8x16xf32>
    %492 = arith.select %488, %490, %491 : vector<8x16xi1>, vector<8x16xf32>
    %493 = arith.addf %464, %492 : vector<8x16xf32>
    %c15_i32 = arith.constant 15 : i32
    %494 = vector.broadcast %c15_i32 : i32 to vector<1x16xi32>
    %495 = arith.cmpi eq, %232, %494 : vector<1x16xi32>
    %cst_165 = arith.constant 0.000000e+00 : f32
    %496 = vector.shape_cast %495 : vector<1x16xi1> to vector<1x16xi1>
    %497 = vector.broadcast %496 : vector<1x16xi1> to vector<8x16xi1>
    %498 = vector.shape_cast %484 : vector<8x1xf32> to vector<8x1xf32>
    %499 = vector.broadcast %498 : vector<8x1xf32> to vector<8x16xf32>
    %500 = vector.broadcast %cst_165 : f32 to vector<8x16xf32>
    %501 = arith.select %497, %499, %500 : vector<8x16xi1>, vector<8x16xf32>
    %502 = arith.addf %493, %501 : vector<8x16xf32>
    %c0_166 = arith.constant 0 : index
    %c0_167 = arith.constant 0 : index
    %503 = vector.load %arg18[%c0_166, %c0_167] : memref<8x16xf32, #tpu.memory_space<vmem>>, vector<8x16xf32>
    tpu.vector_store %arg18[%c0_166, %c0_167], %502 {strides = array<i32>} : memref<8x16xf32, #tpu.memory_space<vmem>>, vector<8x16xf32>,
    return
  }
  func.func @transform_0(%arg0: i32) -> (i32, i32) {
    %c0_i32 = arith.constant 0 : i32
    %c0_i32_0 = arith.constant 0 : i32
    return %arg0, %c0_i32 : i32, i32
  }
  func.func @transform_1(%arg0: i32) -> (i32, i32, i32) {
    %c0_i32 = arith.constant 0 : i32
    %c0_i32_0 = arith.constant 0 : i32
    %c0_i32_1 = arith.constant 0 : i32
    %c0_i32_2 = arith.constant 0 : i32
    return %c0_i32, %c0_i32_0, %c0_i32_1 : i32, i32, i32
  }
  func.func @transform_2(%arg0: i32) -> (i32, i32) {
    %c0_i32 = arith.constant 0 : i32
    %c0_i32_0 = arith.constant 0 : i32
    %c0_i32_1 = arith.constant 0 : i32
    return %c0_i32, %c0_i32_0 : i32, i32
  }
  func.func @transform_3(%arg0: i32) -> (i32, i32, i32) {
    %c0_i32 = arith.constant 0 : i32
    %c0_i32_0 = arith.constant 0 : i32
    %c0_i32_1 = arith.constant 0 : i32
    %c0_i32_2 = arith.constant 0 : i32
    return %c0_i32, %c0_i32_0, %c0_i32_1 : i32, i32, i32
  }
  func.func @transform_4(%arg0: i32) -> (i32, i32) {
    %c0_i32 = arith.constant 0 : i32
    %c0_i32_0 = arith.constant 0 : i32
    %c0_i32_1 = arith.constant 0 : i32
    return %c0_i32, %c0_i32_0 : i32, i32
  }
  func.func @transform_5(%arg0: i32) -> (i32, i32, i32) {
    %c0_i32 = arith.constant 0 : i32
    %c0_i32_0 = arith.constant 0 : i32
    %c0_i32_1 = arith.constant 0 : i32
    %c0_i32_2 = arith.constant 0 : i32
    return %c0_i32, %c0_i32_0, %c0_i32_1 : i32, i32, i32
  }
  func.func @transform_6(%arg0: i32) -> (i32, i32) {
    %c0_i32 = arith.constant 0 : i32
    %c0_i32_0 = arith.constant 0 : i32
    %c0_i32_1 = arith.constant 0 : i32
    return %c0_i32, %c0_i32_0 : i32, i32
  }
  func.func @transform_7(%arg0: i32) -> (i32, i32, i32) {
    %c0_i32 = arith.constant 0 : i32
    %c0_i32_0 = arith.constant 0 : i32
    %c0_i32_1 = arith.constant 0 : i32
    %c0_i32_2 = arith.constant 0 : i32
    return %c0_i32, %c0_i32_0, %c0_i32_1 : i32, i32, i32
  }
  func.func @transform_8(%arg0: i32) -> (i32, i32) {
    %c0_i32 = arith.constant 0 : i32
    %c0_i32_0 = arith.constant 0 : i32
    %c0_i32_1 = arith.constant 0 : i32
    return %c0_i32, %c0_i32_0 : i32, i32
  }
  func.func @transform_9(%arg0: i32) -> (i32, i32, i32) {
    %c0_i32 = arith.constant 0 : i32
    %c0_i32_0 = arith.constant 0 : i32
    %c0_i32_1 = arith.constant 0 : i32
    %c0_i32_2 = arith.constant 0 : i32
    return %c0_i32, %c0_i32_0, %c0_i32_1 : i32, i32, i32
  }
  func.func @transform_10(%arg0: i32) -> (i32, i32) {
    %c0_i32 = arith.constant 0 : i32
    %c0_i32_0 = arith.constant 0 : i32
    %c0_i32_1 = arith.constant 0 : i32
    return %c0_i32, %c0_i32_0 : i32, i32
  }
  func.func @transform_11(%arg0: i32) -> (i32, i32, i32) {
    %c0_i32 = arith.constant 0 : i32
    %c0_i32_0 = arith.constant 0 : i32
    %c0_i32_1 = arith.constant 0 : i32
    %c0_i32_2 = arith.constant 0 : i32
    return %c0_i32, %c0_i32_0, %c0_i32_1 : i32, i32, i32
  }
  func.func @transform_12(%arg0: i32) -> (i32, i32) {
    %c0_i32 = arith.constant 0 : i32
    %c0_i32_0 = arith.constant 0 : i32
    %c0_i32_1 = arith.constant 0 : i32
    return %c0_i32, %c0_i32_0 : i32, i32
  }
  func.func @transform_13(%arg0: i32) -> (i32, i32, i32) {
    %c0_i32 = arith.constant 0 : i32
    %c0_i32_0 = arith.constant 0 : i32
    %c0_i32_1 = arith.constant 0 : i32
    %c0_i32_2 = arith.constant 0 : i32
    return %c0_i32, %c0_i32_0, %c0_i32_1 : i32, i32, i32
  }
  func.func @transform_14(%arg0: i32) -> (i32, i32) {
    %c0_i32 = arith.constant 0 : i32
    %c0_i32_0 = arith.constant 0 : i32
    %c0_i32_1 = arith.constant 0 : i32
    return %c0_i32, %c0_i32_0 : i32, i32
  }
  func.func @transform_15(%arg0: i32) -> (i32, i32, i32) {
    %c0_i32 = arith.constant 0 : i32
    %c0_i32_0 = arith.constant 0 : i32
    %c0_i32_1 = arith.constant 0 : i32
    %c0_i32_2 = arith.constant 0 : i32
    return %c0_i32, %c0_i32_0, %c0_i32_1 : i32, i32, i32
  }
  func.func @transform_16(%arg0: i32) -> (i32, i32) {
    %c0_i32 = arith.constant 0 : i32
    %c0_i32_0 = arith.constant 0 : i32
    %c0_i32_1 = arith.constant 0 : i32
    return %c0_i32, %c0_i32_0 : i32, i32
  }
  func.func @transform_17(%arg0: i32) -> (i32, i32) {
    %c0_i32 = arith.constant 0 : i32
    %c0_i32_0 = arith.constant 0 : i32
    return %arg0, %c0_i32 : i32, i32
  }
}

</mosaic_0001>

<llo_original>
// kernel: autoencoder_forward.1
$region0: #{autoencoder_forward.1}
  #allocation0 [shape = 'u32[]', space=smem, size = 0x4, offset = 0x4, fixed_abs, tag = 'smem constant byte address 0x4 - core index']
  #allocation1 [shape = 'u32[72,128]{1,0:T(1,128)}', space=vmem, size = 0x9000, scoped, tag = 'internal scratch']
  #allocation2 [shape = 'f32[1,1]{1,0:T(1,128)S(1)}', space=vmem, size = 0x200, scoped, tag = 'scoped memory for autoencoder_forward.1']
  %s0 = inlined_call_operand.vmem [shape: f32[8,16], index: 0, kind: input, shape index: {}]
  %s1 = inlined_call_operand.vmem [shape: f32[3,1,16], index: 1, kind: input, shape index: {}]
  %s2 = inlined_call_operand.vmem [shape: f32[1,16], index: 2, kind: input, shape index: {}]
  %s3 = inlined_call_operand.vmem [shape: f32[3,16,32], index: 3, kind: input, shape index: {}]
  %s4 = inlined_call_operand.vmem [shape: f32[1,32], index: 4, kind: input, shape index: {}]
  %s5 = inlined_call_operand.vmem [shape: f32[3,32,64], index: 5, kind: input, shape index: {}]
  %s6 = inlined_call_operand.vmem [shape: f32[1,64], index: 6, kind: input, shape index: {}]
  %s7 = inlined_call_operand.vmem [shape: f32[3,64,128], index: 7, kind: input, shape index: {}]
  %s8 = inlined_call_operand.vmem [shape: f32[1,128], index: 8, kind: input, shape index: {}]
  %s9 = inlined_call_operand.vmem [shape: f32[3,128,64], index: 9, kind: input, shape index: {}]
  %s10 = inlined_call_operand.vmem [shape: f32[1,64], index: 10, kind: input, shape index: {}]
  %s11 = inlined_call_operand.vmem [shape: f32[3,64,32], index: 11, kind: input, shape index: {}]
  %s12 = inlined_call_operand.vmem [shape: f32[1,32], index: 12, kind: input, shape index: {}]
  %s13 = inlined_call_operand.vmem [shape: f32[3,32,16], index: 13, kind: input, shape index: {}]
  %s14 = inlined_call_operand.vmem [shape: f32[1,16], index: 14, kind: input, shape index: {}]
  %s15 = inlined_call_operand.vmem [shape: f32[3,1,16], index: 15, kind: input, shape index: {}]
  %s16 = inlined_call_operand.<no memory space> [shape: f32[1,1], index: 16, kind: input, shape index: {}]
  %s17 = inlined_call_operand.vmem [shape: f32[8,16], index: 17, kind: output, shape index: {}]
  %s18 = sld [smem:[#allocation0]]
  $region78: #{autoencoder_forward.1} parent=0
    _
  %s20 = ssub.s32 1, %s18
  %s21 = scalar_select 0, %s20, %s18
  %v22 = vstv %s16
  %23 = vst [vmem:[#allocation2] sm:$0x1] %v22
  // Predicated region
  $region2: #{autoencoder_forward.1} parent=0 // pred_check
    _
  $region3: #{autoencoder_forward.1} parent=0 // pred_check_branch
    %25 = sbr.rel (0) target = $region5
  $region4: #{autoencoder_forward.1} parent=0 // pred_region
    _
  $region5: #{autoencoder_forward.1} parent=0 // pred_fallthru
    _
  // Predicated region
  $region6: #{autoencoder_forward.1} parent=0 // pred_check
    _
  $region7: #{autoencoder_forward.1} parent=0 // pred_check_branch
    %27 = sbr.rel (0) target = $region9
  $region8: #{autoencoder_forward.1} parent=0 // pred_region
    _
  $region9: #{autoencoder_forward.1} parent=0 // pred_fallthru
    _
  // Predicated region
  $region10: #{autoencoder_forward.1} parent=0 // pred_check
    _
  $region11: #{autoencoder_forward.1} parent=0 // pred_check_branch
    %29 = sbr.rel (0) target = $region13
  $region12: #{autoencoder_forward.1} parent=0 // pred_region
    _
  $region13: #{autoencoder_forward.1} parent=0 // pred_fallthru
    _
  // Predicated region
  $region14: #{autoencoder_forward.1} parent=0 // pred_check
    _
  $region15: #{autoencoder_forward.1} parent=0 // pred_check_branch
    %31 = sbr.rel (0) target = $region17
  $region16: #{autoencoder_forward.1} parent=0 // pred_region
    _
  $region17: #{autoencoder_forward.1} parent=0 // pred_fallthru
    _
  // Predicated region
  $region18: #{autoencoder_forward.1} parent=0 // pred_check
    _
  $region19: #{autoencoder_forward.1} parent=0 // pred_check_branch
    %33 = sbr.rel (0) target = $region21
  $region20: #{autoencoder_forward.1} parent=0 // pred_region
    _
  $region21: #{autoencoder_forward.1} parent=0 // pred_fallthru
    _
  // Predicated region
  $region22: #{autoencoder_forward.1} parent=0 // pred_check
    _
  $region23: #{autoencoder_forward.1} parent=0 // pred_check_branch
    %35 = sbr.rel (0) target = $region25
  $region24: #{autoencoder_forward.1} parent=0 // pred_region
    _
  $region25: #{autoencoder_forward.1} parent=0 // pred_fallthru
    _
  // Predicated region
  $region26: #{autoencoder_forward.1} parent=0 // pred_check
    _
  $region27: #{autoencoder_forward.1} parent=0 // pred_check_branch
    %37 = sbr.rel (0) target = $region29
  $region28: #{autoencoder_forward.1} parent=0 // pred_region
    _
  $region29: #{autoencoder_forward.1} parent=0 // pred_fallthru
    _
  // Predicated region
  $region30: #{autoencoder_forward.1} parent=0 // pred_check
    _
  $region31: #{autoencoder_forward.1} parent=0 // pred_check_branch
    %39 = sbr.rel (0) target = $region33
  $region32: #{autoencoder_forward.1} parent=0 // pred_region
    _
  $region33: #{autoencoder_forward.1} parent=0 // pred_fallthru
    _
  // Predicated region
  $region34: #{autoencoder_forward.1} parent=0 // pred_check
    _
  $region35: #{autoencoder_forward.1} parent=0 // pred_check_branch
    %41 = sbr.rel (0) target = $region37
  $region36: #{autoencoder_forward.1} parent=0 // pred_region
    _
  $region37: #{autoencoder_forward.1} parent=0 // pred_fallthru
    _
  // Predicated region
  $region38: #{autoencoder_forward.1} parent=0 // pred_check
    _
  $region39: #{autoencoder_forward.1} parent=0 // pred_check_branch
    %43 = sbr.rel (0) target = $region41
  $region40: #{autoencoder_forward.1} parent=0 // pred_region
    _
  $region41: #{autoencoder_forward.1} parent=0 // pred_fallthru
    _
  // Predicated region
  $region42: #{autoencoder_forward.1} parent=0 // pred_check
    _
  $region43: #{autoencoder_forward.1} parent=0 // pred_check_branch
    %45 = sbr.rel (0) target = $region45
  $region44: #{autoencoder_forward.1} parent=0 // pred_region
    _
  $region45: #{autoencoder_forward.1} parent=0 // pred_fallthru
    _
  // Predicated region
  $region46: #{autoencoder_forward.1} parent=0 // pred_check
    _
  $region47: #{autoencoder_forward.1} parent=0 // pred_check_branch
    %47 = sbr.rel (0) target = $region49
  $region48: #{autoencoder_forward.1} parent=0 // pred_region
    _
  $region49: #{autoencoder_forward.1} parent=0 // pred_fallthru
    _
  // Predicated region
  $region50: #{autoencoder_forward.1} parent=0 // pred_check
    _
  $region51: #{autoencoder_forward.1} parent=0 // pred_check_branch
    %49 = sbr.rel (0) target = $region53
  $region52: #{autoencoder_forward.1} parent=0 // pred_region
    _
  $region53: #{autoencoder_forward.1} parent=0 // pred_fallthru
    _
  // Predicated region
  $region54: #{autoencoder_forward.1} parent=0 // pred_check
    _
  $region55: #{autoencoder_forward.1} parent=0 // pred_check_branch
    %51 = sbr.rel (0) target = $region57
  $region56: #{autoencoder_forward.1} parent=0 // pred_region
    _
  $region57: #{autoencoder_forward.1} parent=0 // pred_fallthru
    _
  // Predicated region
  $region58: #{autoencoder_forward.1} parent=0 // pred_check
    _
  $region59: #{autoencoder_forward.1} parent=0 // pred_check_branch
    %53 = sbr.rel (0) target = $region61
  $region60: #{autoencoder_forward.1} parent=0 // pred_region
    _
  $region61: #{autoencoder_forward.1} parent=0 // pred_fallthru
    _
  // Predicated region
  $region62: #{autoencoder_forward.1} parent=0 // pred_check
    _
  $region63: #{autoencoder_forward.1} parent=0 // pred_check_branch
    %55 = sbr.rel (0) target = $region65
  $region64: #{autoencoder_forward.1} parent=0 // pred_region
    _
  $region65: #{autoencoder_forward.1} parent=0 // pred_fallthru
    _
  // Predicated region
  $region66: #{autoencoder_forward.1} parent=0 // pred_check
    _
  $region67: #{autoencoder_forward.1} parent=0 // pred_check_branch
    %57 = sbr.rel (0) target = $region69
  $region68: #{autoencoder_forward.1} parent=0 // pred_region
    _
  $region69: #{autoencoder_forward.1} parent=0 // pred_fallthru
    _
  %v58 = vld [vmem:[%s0] sm:$0xff]
  %v59 = vlaneseq
  %v60 = vshrl.u32 %v59, 7
  %vm61 = vcmp.eq.s32.totalorder %v60, 0
  %vm62 = vcmp.eq.s32.totalorder %v60, 3
  %vm63 = vcmp.eq.s32.totalorder %v60, 4
  %vm64 = vmor %vm61, %vm63
  %vm65 = vcmp.eq.s32.totalorder %v60, 7
  %vm66 = vmor %vm62, %vm65
  %v67 = vld [vmem:[%s1] sm:$0x1]
  %s68 = scalar_lea.vmem %s1, 1
  %v69 = vld [vmem:[%s68] sm:$0x1]
  %s70 = scalar_lea.vmem %s1, 2
  %v71 = vld [vmem:[%s70] sm:$0x1]
  %v72 = vld [vmem:[%s2] sm:$0x1]
  %74 = vrot.lane.b32.xlu0 %v58, 113
  %v75 = vpop.permute.xlu0 %74
  %v77 = vrot.slane %v75, 7
  %v78 = vsel %vm64, 0.0, %v77
  %79 = vrot.lane.b32.xlu0 %v58, 127
  %v80 = vpop.permute.xlu0 %79
  %81 = vrot.lane.b32.xlu0 %v58, 125
  %v82 = vpop.permute.xlu0 %81
  %83 = vrot.lane.b32.xlu0 %v58, 123
  %v84 = vpop.permute.xlu0 %83
  %85 = vrot.lane.b32.xlu0 %v58, 121
  %v86 = vpop.permute.xlu0 %85
  %87 = vrot.lane.b32.xlu0 %v58, 119
  %v88 = vpop.permute.xlu0 %87
  %89 = vrot.lane.b32.xlu0 %v58, 117
  %v90 = vpop.permute.xlu0 %89
  %91 = vrot.lane.b32.xlu0 %v58, 115
  %v92 = vpop.permute.xlu0 %91
  %93 = vrot.lane.b32.xlu0 %v58, 126
  %v94 = vpop.permute.xlu0 %93
  %95 = vrot.lane.b32.xlu0 %v58, 124
  %v96 = vpop.permute.xlu0 %95
  %97 = vrot.lane.b32.xlu0 %v58, 122
  %v98 = vpop.permute.xlu0 %97
  %99 = vrot.lane.b32.xlu0 %v58, 120
  %v100 = vpop.permute.xlu0 %99
  %101 = vrot.lane.b32.xlu0 %v58, 118
  %v102 = vpop.permute.xlu0 %101
  %103 = vrot.lane.b32.xlu0 %v58, 116
  %v104 = vpop.permute.xlu0 %103
  %105 = vrot.lane.b32.xlu0 %v58, 114
  %v106 = vpop.permute.xlu0 %105
  %108 = vset.pattern.permute.xlu0 0
  %109 = vperm.xlu0 %108, %v78
  %v110 = vpop.permute.xlu0 %109
  %112 = vset.pattern.permute.xlu0 0
  %113 = vperm.xlu0 %112, %v80
  %v114 = vpop.permute.xlu0 %113
  %116 = vset.pattern.permute.xlu0 0
  %117 = vperm.xlu0 %116, %v82
  %v118 = vpop.permute.xlu0 %117
  %120 = vset.pattern.permute.xlu0 0
  %121 = vperm.xlu0 %120, %v84
  %v122 = vpop.permute.xlu0 %121
  %124 = vset.pattern.permute.xlu0 0
  %125 = vperm.xlu0 %124, %v86
  %v126 = vpop.permute.xlu0 %125
  %128 = vset.pattern.permute.xlu0 0
  %129 = vperm.xlu0 %128, %v88
  %v130 = vpop.permute.xlu0 %129
  %132 = vset.pattern.permute.xlu0 0
  %133 = vperm.xlu0 %132, %v90
  %v134 = vpop.permute.xlu0 %133
  %136 = vset.pattern.permute.xlu0 0
  %137 = vperm.xlu0 %136, %v92
  %v138 = vpop.permute.xlu0 %137
  %v141 = vperm.slane %v67, 0
  %v143 = vmul.f32 %v110, %v141
  %v144 = vmul.f32 %v114, %v141
  %v145 = vmul.f32 %v118, %v141
  %v146 = vmul.f32 %v122, %v141
  %v147 = vmul.f32 %v126, %v141
  %v148 = vmul.f32 %v130, %v141
  %v149 = vmul.f32 %v134, %v141
  %v150 = vmul.f32 %v138, %v141
  %151 = vset.pattern.permute.xlu0 0
  %152 = vperm.xlu0 %151, %v58
  %v153 = vpop.permute.xlu0 %152
  %155 = vset.pattern.permute.xlu0 0
  %156 = vperm.xlu0 %155, %v94
  %v157 = vpop.permute.xlu0 %156
  %159 = vset.pattern.permute.xlu0 0
  %160 = vperm.xlu0 %159, %v96
  %v161 = vpop.permute.xlu0 %160
  %163 = vset.pattern.permute.xlu0 0
  %164 = vperm.xlu0 %163, %v98
  %v165 = vpop.permute.xlu0 %164
  %167 = vset.pattern.permute.xlu0 0
  %168 = vperm.xlu0 %167, %v100
  %v169 = vpop.permute.xlu0 %168
  %171 = vset.pattern.permute.xlu0 0
  %172 = vperm.xlu0 %171, %v102
  %v173 = vpop.permute.xlu0 %172
  %175 = vset.pattern.permute.xlu0 0
  %176 = vperm.xlu0 %175, %v104
  %v177 = vpop.permute.xlu0 %176
  %179 = vset.pattern.permute.xlu0 0
  %180 = vperm.xlu0 %179, %v106
  %v181 = vpop.permute.xlu0 %180
  %v184 = vperm.slane %v69, 0
  %v186 = vmul.f32 %v153, %v184
  %v187 = vmul.f32 %v157, %v184
  %v188 = vmul.f32 %v161, %v184
  %v189 = vmul.f32 %v165, %v184
  %v190 = vmul.f32 %v169, %v184
  %v191 = vmul.f32 %v173, %v184
  %v192 = vmul.f32 %v177, %v184
  %v193 = vmul.f32 %v181, %v184
  %v194 = vadd.f32 %v143, %v186
  %v195 = vadd.f32 %v144, %v187
  %v196 = vadd.f32 %v145, %v188
  %v197 = vadd.f32 %v146, %v189
  %v198 = vadd.f32 %v147, %v190
  %v199 = vadd.f32 %v148, %v191
  %v200 = vadd.f32 %v149, %v192
  %v201 = vadd.f32 %v150, %v193
  %202 = vset.pattern.permute.xlu0 1
  %203 = vperm.xlu0 %202, %v58
  %v204 = vpop.permute.xlu0 %203
  %206 = vset.pattern.permute.xlu0 1
  %207 = vperm.xlu0 %206, %v94
  %v208 = vpop.permute.xlu0 %207
  %210 = vset.pattern.permute.xlu0 1
  %211 = vperm.xlu0 %210, %v96
  %v212 = vpop.permute.xlu0 %211
  %214 = vset.pattern.permute.xlu0 1
  %215 = vperm.xlu0 %214, %v98
  %v216 = vpop.permute.xlu0 %215
  %218 = vset.pattern.permute.xlu0 1
  %219 = vperm.xlu0 %218, %v100
  %v220 = vpop.permute.xlu0 %219
  %222 = vset.pattern.permute.xlu0 1
  %223 = vperm.xlu0 %222, %v102
  %v224 = vpop.permute.xlu0 %223
  %226 = vset.pattern.permute.xlu0 1
  %227 = vperm.xlu0 %226, %v104
  %v228 = vpop.permute.xlu0 %227
  %230 = vset.pattern.permute.xlu0 1
  %231 = vperm.xlu0 %230, %v106
  %v232 = vpop.permute.xlu0 %231
  %v235 = vperm.slane %v71, 0
  %v237 = vmul.f32 %v204, %v235
  %v238 = vmul.f32 %v208, %v235
  %v239 = vmul.f32 %v212, %v235
  %v240 = vmul.f32 %v216, %v235
  %v241 = vmul.f32 %v220, %v235
  %v242 = vmul.f32 %v224, %v235
  %v243 = vmul.f32 %v228, %v235
  %v244 = vmul.f32 %v232, %v235
  %v245 = vadd.f32 %v194, %v237
  %v246 = vadd.f32 %v195, %v238
  %v247 = vadd.f32 %v196, %v239
  %v248 = vadd.f32 %v197, %v240
  %v249 = vadd.f32 %v198, %v241
  %v250 = vadd.f32 %v199, %v242
  %v251 = vadd.f32 %v200, %v243
  %v252 = vadd.f32 %v201, %v244
  %v254 = vperm.slane %v72, 0
  %v256 = vadd.f32 %v245, %v254
  %v257 = vadd.f32 %v246, %v254
  %v258 = vadd.f32 %v247, %v254
  %v259 = vadd.f32 %v248, %v254
  %v260 = vadd.f32 %v249, %v254
  %v261 = vadd.f32 %v250, %v254
  %v262 = vadd.f32 %v251, %v254
  %v263 = vadd.f32 %v252, %v254
  %v264 = vmax.f32 %v256, 0.0
  %v265 = vmax.f32 %v257, 0.0
  %v266 = vmax.f32 %v258, 0.0
  %v267 = vmax.f32 %v259, 0.0
  %v268 = vmax.f32 %v260, 0.0
  %v269 = vmax.f32 %v261, 0.0
  %v270 = vmax.f32 %v262, 0.0
  %v271 = vmax.f32 %v263, 0.0
  %v272 = vld [vmem:[%s3] sm:$0xff]
  %v273 = vld [vmem:[%s3 + $0x8] sm:$0xff]
  %s274 = scalar_lea.vmem %s3, 16
  %v275 = vld [vmem:[%s274] sm:$0xff]
  %v276 = vld [vmem:[%s274 + $0x8] sm:$0xff]
  %s277 = scalar_lea.vmem %s3, 32
  %v278 = vld [vmem:[%s277] sm:$0xff]
  %v279 = vld [vmem:[%s277 + $0x8] sm:$0xff]
  %v280 = vld [vmem:[%s4] sm:$0x1]
  %v281 = vrot.slane %v271, 7
  %v282 = vsel %vm64, 1, 0
  %vm283 = vcmp.eq.s32.totalorder %v282, 1
  %v284 = vsel %vm283, 0.0, %v281
  %vm285 = vcmask 130048
  %v287 = vsel %vm285, %v264, 0
  %v290 = vsel %vm285, %v266, 0
  %v293 = vsel %vm285, %v268, 0
  %v296 = vsel %vm285, %v270, 0
  %298 = vmatpush.msra.mxu0 0.0
  %299 = vmatpush.msra.mxu0 0.0
  %300 = vmatpush.msra.mxu0 0.0
  %301 = vmatpush.msra.mxu0 0.0
  %302 = vmatpush.msra.mxu0 0.0
  %303 = vmatpush.msra.mxu0 0.0
  %304 = vmatpush.msra.mxu0 0.0
  %305 = vmatpush.msra.mxu0 0.0
  %306 = vmatpush.msra.mxu0 0.0
  %307 = vmatpush.msra.mxu0 0.0
  %308 = vmatpush.msra.mxu0 0.0
  %309 = vmatpush.msra.mxu0 0.0
  %310 = vmatpush.msra.mxu0 0.0
  %311 = vmatpush.msra.mxu0 0.0
  %312 = vmatpush.msra.mxu0 %v276
  %313 = vmatpush.msra.mxu0 %v275
  %314 = vmatmul.f32.gmra.mxu0 %v287
  %v315 = vpop.f32.mrf.mxu0
  %v316 = vadd.f32 0.0, %v315
  %317 = vmatmul.f32.gmra.mxu0 %v290
  %v318 = vpop.f32.mrf.mxu0
  %v319 = vadd.f32 0.0, %v318
  %320 = vmatmul.f32.gmra.mxu0 %v293
  %v321 = vpop.f32.mrf.mxu0
  %v322 = vadd.f32 0.0, %v321
  %323 = vmatmul.f32.gmra.mxu0 %v296
  %v324 = vpop.f32.mrf.mxu0
  %v325 = vadd.f32 0.0, %v324
  %326 = vdwg.mxu0
  %v328 = vsel %vm285, %v284, 0
  %v331 = vsel %vm285, %v265, 0
  %v334 = vsel %vm285, %v267, 0
  %v337 = vsel %vm285, %v269, 0
  %339 = vmatpush.msra.mxu0 0.0
  %340 = vmatpush.msra.mxu0 0.0
  %341 = vmatpush.msra.mxu0 0.0
  %342 = vmatpush.msra.mxu0 0.0
  %343 = vmatpush.msra.mxu0 0.0
  %344 = vmatpush.msra.mxu0 0.0
  %345 = vmatpush.msra.mxu0 0.0
  %346 = vmatpush.msra.mxu0 0.0
  %347 = vmatpush.msra.mxu0 0.0
  %348 = vmatpush.msra.mxu0 0.0
  %349 = vmatpush.msra.mxu0 0.0
  %350 = vmatpush.msra.mxu0 0.0
  %351 = vmatpush.msra.mxu0 0.0
  %352 = vmatpush.msra.mxu0 0.0
  %353 = vmatpush.msra.mxu0 %v273
  %354 = vmatpush.msra.mxu0 %v272
  %355 = vmatmul.f32.gmra.mxu0 %v328
  %v356 = vpop.f32.mrf.mxu0
  %v357 = vadd.f32 %v316, %v356
  %358 = vmatmul.f32.gmra.mxu0 %v331
  %v359 = vpop.f32.mrf.mxu0
  %v360 = vadd.f32 %v319, %v359
  %361 = vmatmul.f32.gmra.mxu0 %v334
  %v362 = vpop.f32.mrf.mxu0
  %v363 = vadd.f32 %v322, %v362
  %364 = vmatmul.f32.gmra.mxu0 %v337
  %v365 = vpop.f32.mrf.mxu0
  %v366 = vadd.f32 %v325, %v365
  %367 = vdwg.mxu0
  %v369 = vsel %vm285, %v271, 0
  %371 = vmatpush.msra.mxu0 0.0
  %372 = vmatpush.msra.mxu0 0.0
  %373 = vmatpush.msra.mxu0 0.0
  %374 = vmatpush.msra.mxu0 0.0
  %375 = vmatpush.msra.mxu0 0.0
  %376 = vmatpush.msra.mxu0 0.0
  %377 = vmatpush.msra.mxu0 0.0
  %378 = vmatpush.msra.mxu0 0.0
  %379 = vmatpush.msra.mxu0 0.0
  %380 = vmatpush.msra.mxu0 0.0
  %381 = vmatpush.msra.mxu0 0.0
  %382 = vmatpush.msra.mxu0 0.0
  %383 = vmatpush.msra.mxu0 0.0
  %384 = vmatpush.msra.mxu0 0.0
  %385 = vmatpush.msra.mxu0 %v279
  %386 = vmatpush.msra.mxu0 %v278
  %387 = vmatmul.f32.gmra.mxu0 %v331
  %v388 = vpop.f32.mrf.mxu0
  %v389 = vadd.f32 0.0, %v388
  %390 = vmatmul.f32.gmra.mxu0 %v334
  %v391 = vpop.f32.mrf.mxu0
  %v392 = vadd.f32 0.0, %v391
  %393 = vmatmul.f32.gmra.mxu0 %v337
  %v394 = vpop.f32.mrf.mxu0
  %v395 = vadd.f32 0.0, %v394
  %396 = vmatmul.f32.gmra.mxu0 %v369
  %v397 = vpop.f32.mrf.mxu0
  %v398 = vadd.f32 0.0, %v397
  %399 = vdwg.mxu0
  %v400 = vadd.f32 %v357, %v389
  %v401 = vadd.f32 %v360, %v392
  %v402 = vadd.f32 %v363, %v395
  %v403 = vadd.f32 %v366, %v398
  %v405 = vperm.slane %v280, 0
  %v407 = vadd.f32 %v400, %v405
  %v408 = vadd.f32 %v401, %v405
  %v409 = vadd.f32 %v402, %v405
  %v410 = vadd.f32 %v403, %v405
  %v411 = vmax.f32 %v407, 0.0
  %v412 = vmax.f32 %v408, 0.0
  %v413 = vmax.f32 %v409, 0.0
  %v414 = vmax.f32 %v410, 0.0
  %v415 = vld [vmem:[%s5] sm:$0xff]
  %v416 = vld [vmem:[%s5 + $0x8] sm:$0xff]
  %v417 = vld [vmem:[%s5 + $0x10] sm:$0xff]
  %v418 = vld [vmem:[%s5 + $0x18] sm:$0xff]
  %s419 = scalar_lea.vmem %s5, 32
  %v420 = vld [vmem:[%s419] sm:$0xff]
  %v421 = vld [vmem:[%s419 + $0x8] sm:$0xff]
  %v422 = vld [vmem:[%s419 + $0x10] sm:$0xff]
  %v423 = vld [vmem:[%s419 + $0x18] sm:$0xff]
  %s424 = scalar_lea.vmem %s5, 64
  %v425 = vld [vmem:[%s424] sm:$0xff]
  %v426 = vld [vmem:[%s424 + $0x8] sm:$0xff]
  %v427 = vld [vmem:[%s424 + $0x10] sm:$0xff]
  %v428 = vld [vmem:[%s424 + $0x18] sm:$0xff]
  %v429 = vld [vmem:[%s6] sm:$0x1]
  %v430 = vrot.slane %v414, 7
  %v431 = vsel %vm283, 0.0, %v430
  %vm432 = vcmask 261120
  %v434 = vsel %vm432, %v411, 0
  %v437 = vsel %vm432, %v413, 0
  %439 = vmatpush.msra.mxu0 0.0
  %440 = vmatpush.msra.mxu0 0.0
  %441 = vmatpush.msra.mxu0 0.0
  %442 = vmatpush.msra.mxu0 0.0
  %443 = vmatpush.msra.mxu0 0.0
  %444 = vmatpush.msra.mxu0 0.0
  %445 = vmatpush.msra.mxu0 0.0
  %446 = vmatpush.msra.mxu0 0.0
  %447 = vmatpush.msra.mxu0 0.0
  %448 = vmatpush.msra.mxu0 0.0
  %449 = vmatpush.msra.mxu0 0.0
  %450 = vmatpush.msra.mxu0 0.0
  %451 = vmatpush.msra.mxu0 %v423
  %452 = vmatpush.msra.mxu0 %v422
  %453 = vmatpush.msra.mxu0 %v421
  %454 = vmatpush.msra.mxu0 %v420
  %455 = vmatmul.f32.gmra.mxu0 %v434
  %v456 = vpop.f32.mrf.mxu0
  %v457 = vadd.f32 0.0, %v456
  %458 = vmatmul.f32.gmra.mxu0 %v437
  %v459 = vpop.f32.mrf.mxu0
  %v460 = vadd.f32 0.0, %v459
  %461 = vdwg.mxu0
  %v463 = vsel %vm432, %v431, 0
  %v466 = vsel %vm432, %v412, 0
  %468 = vmatpush.msra.mxu0 0.0
  %469 = vmatpush.msra.mxu0 0.0
  %470 = vmatpush.msra.mxu0 0.0
  %471 = vmatpush.msra.mxu0 0.0
  %472 = vmatpush.msra.mxu0 0.0
  %473 = vmatpush.msra.mxu0 0.0
  %474 = vmatpush.msra.mxu0 0.0
  %475 = vmatpush.msra.mxu0 0.0
  %476 = vmatpush.msra.mxu0 0.0
  %477 = vmatpush.msra.mxu0 0.0
  %478 = vmatpush.msra.mxu0 0.0
  %479 = vmatpush.msra.mxu0 0.0
  %480 = vmatpush.msra.mxu0 %v418
  %481 = vmatpush.msra.mxu0 %v417
  %482 = vmatpush.msra.mxu0 %v416
  %483 = vmatpush.msra.mxu0 %v415
  %484 = vmatmul.f32.gmra.mxu0 %v463
  %v485 = vpop.f32.mrf.mxu0
  %v486 = vadd.f32 %v457, %v485
  %487 = vmatmul.f32.gmra.mxu0 %v466
  %v488 = vpop.f32.mrf.mxu0
  %v489 = vadd.f32 %v460, %v488
  %490 = vdwg.mxu0
  %v492 = vsel %vm432, %v414, 0
  %494 = vmatpush.msra.mxu0 0.0
  %495 = vmatpush.msra.mxu0 0.0
  %496 = vmatpush.msra.mxu0 0.0
  %497 = vmatpush.msra.mxu0 0.0
  %498 = vmatpush.msra.mxu0 0.0
  %499 = vmatpush.msra.mxu0 0.0
  %500 = vmatpush.msra.mxu0 0.0
  %501 = vmatpush.msra.mxu0 0.0
  %502 = vmatpush.msra.mxu0 0.0
  %503 = vmatpush.msra.mxu0 0.0
  %504 = vmatpush.msra.mxu0 0.0
  %505 = vmatpush.msra.mxu0 0.0
  %506 = vmatpush.msra.mxu0 %v428
  %507 = vmatpush.msra.mxu0 %v427
  %508 = vmatpush.msra.mxu0 %v426
  %509 = vmatpush.msra.mxu0 %v425
  %510 = vmatmul.f32.gmra.mxu0 %v466
  %v511 = vpop.f32.mrf.mxu0
  %v512 = vadd.f32 0.0, %v511
  %513 = vmatmul.f32.gmra.mxu0 %v492
  %v514 = vpop.f32.mrf.mxu0
  %v515 = vadd.f32 0.0, %v514
  %516 = vdwg.mxu0
  %v517 = vadd.f32 %v486, %v512
  %v518 = vadd.f32 %v489, %v515
  %v520 = vperm.slane %v429, 0
  %v522 = vadd.f32 %v517, %v520
  %v523 = vadd.f32 %v518, %v520
  %v524 = vmax.f32 %v522, 0.0
  %v525 = vmax.f32 %v523, 0.0
  %v526 = vld [vmem:[%s7] sm:$0xff]
  %v527 = vld [vmem:[%s7 + $0x8] sm:$0xff]
  %v528 = vld [vmem:[%s7 + $0x10] sm:$0xff]
  %v529 = vld [vmem:[%s7 + $0x18] sm:$0xff]
  %v530 = vld [vmem:[%s7 + $0x20] sm:$0xff]
  %v531 = vld [vmem:[%s7 + $0x28] sm:$0xff]
  %v532 = vld [vmem:[%s7 + $0x30] sm:$0xff]
  %v533 = vld [vmem:[%s7 + $0x38] sm:$0xff]
  %s534 = scalar_lea.vmem %s7, 64
  %v535 = vld [vmem:[%s534] sm:$0xff]
  %v536 = vld [vmem:[%s534 + $0x8] sm:$0xff]
  %v537 = vld [vmem:[%s534 + $0x10] sm:$0xff]
  %v538 = vld [vmem:[%s534 + $0x18] sm:$0xff]
  %v539 = vld [vmem:[%s534 + $0x20] sm:$0xff]
  %v540 = vld [vmem:[%s534 + $0x28] sm:$0xff]
  %v541 = vld [vmem:[%s534 + $0x30] sm:$0xff]
  %v542 = vld [vmem:[%s534 + $0x38] sm:$0xff]
  %s543 = scalar_lea.vmem %s7, 128
  %v544 = vld [vmem:[%s543] sm:$0xff]
  %v545 = vld [vmem:[%s543 + $0x8] sm:$0xff]
  %v546 = vld [vmem:[%s543 + $0x10] sm:$0xff]
  %v547 = vld [vmem:[%s543 + $0x18] sm:$0xff]
  %v548 = vld [vmem:[%s543 + $0x20] sm:$0xff]
  %v549 = vld [vmem:[%s543 + $0x28] sm:$0xff]
  %v550 = vld [vmem:[%s543 + $0x30] sm:$0xff]
  %v551 = vld [vmem:[%s543 + $0x38] sm:$0xff]
  %v552 = vld [vmem:[%s8] sm:$0x1]
  %v553 = vrot.slane %v525, 7
  %v554 = vsel %vm283, 0.0, %v553
  %vm555 = vcmask 523264
  %v557 = vsel %vm555, %v524, 0
  %559 = vmatpush.msra.mxu0 0.0
  %560 = vmatpush.msra.mxu0 0.0
  %561 = vmatpush.msra.mxu0 0.0
  %562 = vmatpush.msra.mxu0 0.0
  %563 = vmatpush.msra.mxu0 0.0
  %564 = vmatpush.msra.mxu0 0.0
  %565 = vmatpush.msra.mxu0 0.0
  %566 = vmatpush.msra.mxu0 0.0
  %567 = vmatpush.msra.mxu0 %v542
  %568 = vmatpush.msra.mxu0 %v541
  %569 = vmatpush.msra.mxu0 %v540
  %570 = vmatpush.msra.mxu0 %v539
  %571 = vmatpush.msra.mxu0 %v538
  %572 = vmatpush.msra.mxu0 %v537
  %573 = vmatpush.msra.mxu0 %v536
  %574 = vmatpush.msra.mxu0 %v535
  %575 = vmatmul.f32.gmra.mxu0 %v557
  %v576 = vpop.f32.mrf.mxu0
  %v577 = vadd.f32 0.0, %v576
  %578 = vdwg.mxu0
  %v580 = vsel %vm555, %v554, 0
  %582 = vmatpush.msra.mxu0 0.0
  %583 = vmatpush.msra.mxu0 0.0
  %584 = vmatpush.msra.mxu0 0.0
  %585 = vmatpush.msra.mxu0 0.0
  %586 = vmatpush.msra.mxu0 0.0
  %587 = vmatpush.msra.mxu0 0.0
  %588 = vmatpush.msra.mxu0 0.0
  %589 = vmatpush.msra.mxu0 0.0
  %590 = vmatpush.msra.mxu0 %v533
  %591 = vmatpush.msra.mxu0 %v532
  %592 = vmatpush.msra.mxu0 %v531
  %593 = vmatpush.msra.mxu0 %v530
  %594 = vmatpush.msra.mxu0 %v529
  %595 = vmatpush.msra.mxu0 %v528
  %596 = vmatpush.msra.mxu0 %v527
  %597 = vmatpush.msra.mxu0 %v526
  %598 = vmatmul.f32.gmra.mxu0 %v580
  %v599 = vpop.f32.mrf.mxu0
  %v600 = vadd.f32 %v577, %v599
  %601 = vdwg.mxu0
  %v603 = vsel %vm555, %v525, 0
  %605 = vmatpush.msra.mxu0 0.0
  %606 = vmatpush.msra.mxu0 0.0
  %607 = vmatpush.msra.mxu0 0.0
  %608 = vmatpush.msra.mxu0 0.0
  %609 = vmatpush.msra.mxu0 0.0
  %610 = vmatpush.msra.mxu0 0.0
  %611 = vmatpush.msra.mxu0 0.0
  %612 = vmatpush.msra.mxu0 0.0
  %613 = vmatpush.msra.mxu0 %v551
  %614 = vmatpush.msra.mxu0 %v550
  %615 = vmatpush.msra.mxu0 %v549
  %616 = vmatpush.msra.mxu0 %v548
  %617 = vmatpush.msra.mxu0 %v547
  %618 = vmatpush.msra.mxu0 %v546
  %619 = vmatpush.msra.mxu0 %v545
  %620 = vmatpush.msra.mxu0 %v544
  %621 = vmatmul.f32.gmra.mxu0 %v603
  %v622 = vpop.f32.mrf.mxu0
  %v623 = vadd.f32 0.0, %v622
  %624 = vdwg.mxu0
  %v625 = vadd.f32 %v600, %v623
  %v627 = vperm.slane %v552, 0
  %v629 = vadd.f32 %v625, %v627
  %v630 = vld [vmem:[%s9] sm:$0xff]
  %v631 = vld [vmem:[%s9 + $0x8] sm:$0xff]
  %v632 = vld [vmem:[%s9 + $0x10] sm:$0xff]
  %v633 = vld [vmem:[%s9 + $0x18] sm:$0xff]
  %v634 = vld [vmem:[%s9 + $0x20] sm:$0xff]
  %v635 = vld [vmem:[%s9 + $0x28] sm:$0xff]
  %v636 = vld [vmem:[%s9 + $0x30] sm:$0xff]
  %v637 = vld [vmem:[%s9 + $0x38] sm:$0xff]
  %v638 = vld [vmem:[%s9 + $0x40] sm:$0xff]
  %v639 = vld [vmem:[%s9 + $0x48] sm:$0xff]
  %v640 = vld [vmem:[%s9 + $0x50] sm:$0xff]
  %v641 = vld [vmem:[%s9 + $0x58] sm:$0xff]
  %v642 = vld [vmem:[%s9 + $0x60] sm:$0xff]
  %v643 = vld [vmem:[%s9 + $0x68] sm:$0xff]
  %v644 = vld [vmem:[%s9 + $0x70] sm:$0xff]
  %v645 = vld [vmem:[%s9 + $0x78] sm:$0xff]
  %s646 = scalar_lea.vmem %s9, 128
  %v647 = vld [vmem:[%s646] sm:$0xff]
  %v648 = vld [vmem:[%s646 + $0x8] sm:$0xff]
  %v649 = vld [vmem:[%s646 + $0x10] sm:$0xff]
  %v650 = vld [vmem:[%s646 + $0x18] sm:$0xff]
  %v651 = vld [vmem:[%s646 + $0x20] sm:$0xff]
  %v652 = vld [vmem:[%s646 + $0x28] sm:$0xff]
  %v653 = vld [vmem:[%s646 + $0x30] sm:$0xff]
  %v654 = vld [vmem:[%s646 + $0x38] sm:$0xff]
  %v655 = vld [vmem:[%s646 + $0x40] sm:$0xff]
  %v656 = vld [vmem:[%s646 + $0x48] sm:$0xff]
  %v657 = vld [vmem:[%s646 + $0x50] sm:$0xff]
  %v658 = vld [vmem:[%s646 + $0x58] sm:$0xff]
  %v659 = vld [vmem:[%s646 + $0x60] sm:$0xff]
  %v660 = vld [vmem:[%s646 + $0x68] sm:$0xff]
  %v661 = vld [vmem:[%s646 + $0x70] sm:$0xff]
  %v662 = vld [vmem:[%s646 + $0x78] sm:$0xff]
  %s663 = scalar_lea.vmem %s9, 256
  %v664 = vld [vmem:[%s663] sm:$0xff]
  %v665 = vld [vmem:[%s663 + $0x8] sm:$0xff]
  %v666 = vld [vmem:[%s663 + $0x10] sm:$0xff]
  %v667 = vld [vmem:[%s663 + $0x18] sm:$0xff]
  %v668 = vld [vmem:[%s663 + $0x20] sm:$0xff]
  %v669 = vld [vmem:[%s663 + $0x28] sm:$0xff]
  %v670 = vld [vmem:[%s663 + $0x30] sm:$0xff]
  %v671 = vld [vmem:[%s663 + $0x38] sm:$0xff]
  %v672 = vld [vmem:[%s663 + $0x40] sm:$0xff]
  %v673 = vld [vmem:[%s663 + $0x48] sm:$0xff]
  %v674 = vld [vmem:[%s663 + $0x50] sm:$0xff]
  %v675 = vld [vmem:[%s663 + $0x58] sm:$0xff]
  %v676 = vld [vmem:[%s663 + $0x60] sm:$0xff]
  %v677 = vld [vmem:[%s663 + $0x68] sm:$0xff]
  %v678 = vld [vmem:[%s663 + $0x70] sm:$0xff]
  %v679 = vld [vmem:[%s663 + $0x78] sm:$0xff]
  %v680 = vld [vmem:[%s10] sm:$0x1]
  %v681 = vrot.slane %v629, 1
  %v682 = vsel %vm66, 1, 0
  %vm683 = vcmp.eq.s32.totalorder %v682, 1
  %v684 = vsel %vm683, 0.0, %v681
  %v686 = vperm.slane %v680, 0
  %688 = vmatpush.msra.mxu0 %v662
  %689 = vmatpush.msra.mxu0 %v661
  %690 = vmatpush.msra.mxu0 %v660
  %691 = vmatpush.msra.mxu0 %v659
  %692 = vmatpush.msra.mxu0 %v658
  %693 = vmatpush.msra.mxu0 %v657
  %694 = vmatpush.msra.mxu0 %v656
  %695 = vmatpush.msra.mxu0 %v655
  %696 = vmatpush.msra.mxu0 %v654
  %697 = vmatpush.msra.mxu0 %v653
  %698 = vmatpush.msra.mxu0 %v652
  %699 = vmatpush.msra.mxu0 %v651
  %700 = vmatpush.msra.mxu0 %v650
  %701 = vmatpush.msra.mxu0 %v649
  %702 = vmatpush.msra.mxu0 %v648
  %703 = vmatpush.msra.mxu0 %v647
  %704 = vmatmul.f32.gmra.mxu0 %v629
  %v705 = vpop.f32.mrf.mxu0
  %v706 = vadd.f32 %v686, %v705
  %707 = vdwg.mxu0
  %708 = vmatpush.msra.mxu0 %v679
  %709 = vmatpush.msra.mxu0 %v678
  %710 = vmatpush.msra.mxu0 %v677
  %711 = vmatpush.msra.mxu0 %v676
  %712 = vmatpush.msra.mxu0 %v675
  %713 = vmatpush.msra.mxu0 %v674
  %714 = vmatpush.msra.mxu0 %v673
  %715 = vmatpush.msra.mxu0 %v672
  %716 = vmatpush.msra.mxu0 %v671
  %717 = vmatpush.msra.mxu0 %v670
  %718 = vmatpush.msra.mxu0 %v669
  %719 = vmatpush.msra.mxu0 %v668
  %720 = vmatpush.msra.mxu0 %v667
  %721 = vmatpush.msra.mxu0 %v666
  %722 = vmatpush.msra.mxu0 %v665
  %723 = vmatpush.msra.mxu0 %v664
  %724 = vmatmul.f32.gmra.mxu0 %v629
  %v725 = vpop.f32.mrf.mxu0
  %v726 = vadd.f32 0.0, %v725
  %727 = vdwg.mxu0
  %728 = vmatpush.msra.mxu0 %v645
  %729 = vmatpush.msra.mxu0 %v644
  %730 = vmatpush.msra.mxu0 %v643
  %731 = vmatpush.msra.mxu0 %v642
  %732 = vmatpush.msra.mxu0 %v641
  %733 = vmatpush.msra.mxu0 %v640
  %734 = vmatpush.msra.mxu0 %v639
  %735 = vmatpush.msra.mxu0 %v638
  %736 = vmatpush.msra.mxu0 %v637
  %737 = vmatpush.msra.mxu0 %v636
  %738 = vmatpush.msra.mxu0 %v635
  %739 = vmatpush.msra.mxu0 %v634
  %740 = vmatpush.msra.mxu0 %v633
  %741 = vmatpush.msra.mxu0 %v632
  %742 = vmatpush.msra.mxu0 %v631
  %743 = vmatpush.msra.mxu0 %v630
  %744 = vmatmul.f32.gmra.mxu0 %v684
  %v745 = vpop.f32.mrf.mxu0
  %v746 = vadd.f32 %v726, %v745
  %747 = vdwg.mxu0
  %v748 = vadd.f32 %v746, %v686
  %v749 = vmax.f32 %v706, 0.0
  %v750 = vmax.f32 %v748, 0.0
  %v751 = vld [vmem:[%s11] sm:$0xff]
  %v752 = vld [vmem:[%s11 + $0x8] sm:$0xff]
  %v753 = vld [vmem:[%s11 + $0x10] sm:$0xff]
  %v754 = vld [vmem:[%s11 + $0x18] sm:$0xff]
  %v755 = vld [vmem:[%s11 + $0x20] sm:$0xff]
  %v756 = vld [vmem:[%s11 + $0x28] sm:$0xff]
  %v757 = vld [vmem:[%s11 + $0x30] sm:$0xff]
  %v758 = vld [vmem:[%s11 + $0x38] sm:$0xff]
  %s759 = scalar_lea.vmem %s11, 64
  %v760 = vld [vmem:[%s759] sm:$0xff]
  %v761 = vld [vmem:[%s759 + $0x8] sm:$0xff]
  %v762 = vld [vmem:[%s759 + $0x10] sm:$0xff]
  %v763 = vld [vmem:[%s759 + $0x18] sm:$0xff]
  %v764 = vld [vmem:[%s759 + $0x20] sm:$0xff]
  %v765 = vld [vmem:[%s759 + $0x28] sm:$0xff]
  %v766 = vld [vmem:[%s759 + $0x30] sm:$0xff]
  %v767 = vld [vmem:[%s759 + $0x38] sm:$0xff]
  %s768 = scalar_lea.vmem %s11, 128
  %v769 = vld [vmem:[%s768] sm:$0xff]
  %v770 = vld [vmem:[%s768 + $0x8] sm:$0xff]
  %v771 = vld [vmem:[%s768 + $0x10] sm:$0xff]
  %v772 = vld [vmem:[%s768 + $0x18] sm:$0xff]
  %v773 = vld [vmem:[%s768 + $0x20] sm:$0xff]
  %v774 = vld [vmem:[%s768 + $0x28] sm:$0xff]
  %v775 = vld [vmem:[%s768 + $0x30] sm:$0xff]
  %v776 = vld [vmem:[%s768 + $0x38] sm:$0xff]
  %v777 = vld [vmem:[%s12] sm:$0x1]
  %v778 = vrot.slane %v749, 1
  %v779 = vsel %vm683, 0.0, %v778
  %v781 = vperm.slane %v777, 0
  %v784 = vsel %vm555, %v749, 0
  %v787 = vsel %vm555, %v750, 0
  %789 = vmatpush.msra.mxu0 0.0
  %790 = vmatpush.msra.mxu0 0.0
  %791 = vmatpush.msra.mxu0 0.0
  %792 = vmatpush.msra.mxu0 0.0
  %793 = vmatpush.msra.mxu0 0.0
  %794 = vmatpush.msra.mxu0 0.0
  %795 = vmatpush.msra.mxu0 0.0
  %796 = vmatpush.msra.mxu0 0.0
  %797 = vmatpush.msra.mxu0 %v767
  %798 = vmatpush.msra.mxu0 %v766
  %799 = vmatpush.msra.mxu0 %v765
  %800 = vmatpush.msra.mxu0 %v764
  %801 = vmatpush.msra.mxu0 %v763
  %802 = vmatpush.msra.mxu0 %v762
  %803 = vmatpush.msra.mxu0 %v761
  %804 = vmatpush.msra.mxu0 %v760
  %805 = vmatmul.f32.gmra.mxu0 %v784
  %v806 = vpop.f32.mrf.mxu0
  %v807 = vadd.f32 %v781, %v806
  %808 = vmatmul.f32.gmra.mxu0 %v787
  %v809 = vpop.f32.mrf.mxu0
  %v810 = vadd.f32 %v781, %v809
  %811 = vdwg.mxu0
  %812 = vmatpush.msra.mxu0 0.0
  %813 = vmatpush.msra.mxu0 0.0
  %814 = vmatpush.msra.mxu0 0.0
  %815 = vmatpush.msra.mxu0 0.0
  %816 = vmatpush.msra.mxu0 0.0
  %817 = vmatpush.msra.mxu0 0.0
  %818 = vmatpush.msra.mxu0 0.0
  %819 = vmatpush.msra.mxu0 0.0
  %820 = vmatpush.msra.mxu0 %v776
  %821 = vmatpush.msra.mxu0 %v775
  %822 = vmatpush.msra.mxu0 %v774
  %823 = vmatpush.msra.mxu0 %v773
  %824 = vmatpush.msra.mxu0 %v772
  %825 = vmatpush.msra.mxu0 %v771
  %826 = vmatpush.msra.mxu0 %v770
  %827 = vmatpush.msra.mxu0 %v769
  %828 = vmatmul.f32.gmra.mxu0 %v784
  %v829 = vpop.f32.mrf.mxu0
  %v830 = vadd.f32 0.0, %v829
  %831 = vmatmul.f32.gmra.mxu0 %v787
  %v832 = vpop.f32.mrf.mxu0
  %v833 = vadd.f32 0.0, %v832
  %834 = vdwg.mxu0
  %v836 = vsel %vm555, %v779, 0
  %838 = vmatpush.msra.mxu0 0.0
  %839 = vmatpush.msra.mxu0 0.0
  %840 = vmatpush.msra.mxu0 0.0
  %841 = vmatpush.msra.mxu0 0.0
  %842 = vmatpush.msra.mxu0 0.0
  %843 = vmatpush.msra.mxu0 0.0
  %844 = vmatpush.msra.mxu0 0.0
  %845 = vmatpush.msra.mxu0 0.0
  %846 = vmatpush.msra.mxu0 %v758
  %847 = vmatpush.msra.mxu0 %v757
  %848 = vmatpush.msra.mxu0 %v756
  %849 = vmatpush.msra.mxu0 %v755
  %850 = vmatpush.msra.mxu0 %v754
  %851 = vmatpush.msra.mxu0 %v753
  %852 = vmatpush.msra.mxu0 %v752
  %853 = vmatpush.msra.mxu0 %v751
  %854 = vmatmul.f32.gmra.mxu0 %v787
  %v855 = vpop.f32.mrf.mxu0
  %v856 = vadd.f32 %v830, %v855
  %857 = vmatmul.f32.gmra.mxu0 %v836
  %v858 = vpop.f32.mrf.mxu0
  %v859 = vadd.f32 %v833, %v858
  %860 = vdwg.mxu0
  %v861 = vadd.f32 %v856, %v781
  %v862 = vadd.f32 %v859, %v781
  %v863 = vmax.f32 %v807, 0.0
  %v864 = vmax.f32 %v810, 0.0
  %v865 = vmax.f32 %v861, 0.0
  %v866 = vmax.f32 %v862, 0.0
  %v867 = vld [vmem:[%s13] sm:$0xff]
  %v868 = vld [vmem:[%s13 + $0x8] sm:$0xff]
  %v869 = vld [vmem:[%s13 + $0x10] sm:$0xff]
  %v870 = vld [vmem:[%s13 + $0x18] sm:$0xff]
  %s871 = scalar_lea.vmem %s13, 32
  %v872 = vld [vmem:[%s871] sm:$0xff]
  %v873 = vld [vmem:[%s871 + $0x8] sm:$0xff]
  %v874 = vld [vmem:[%s871 + $0x10] sm:$0xff]
  %v875 = vld [vmem:[%s871 + $0x18] sm:$0xff]
  %s876 = scalar_lea.vmem %s13, 64
  %v877 = vld [vmem:[%s876] sm:$0xff]
  %v878 = vld [vmem:[%s876 + $0x8] sm:$0xff]
  %v879 = vld [vmem:[%s876 + $0x10] sm:$0xff]
  %v880 = vld [vmem:[%s876 + $0x18] sm:$0xff]
  %v881 = vld [vmem:[%s14] sm:$0x1]
  %v882 = vrot.slane %v863, 1
  %v883 = vsel %vm683, 0.0, %v882
  %v885 = vperm.slane %v881, 0
  %v888 = vsel %vm432, %v863, 0
  %v891 = vsel %vm432, %v865, 0
  %v894 = vsel %vm432, %v864, 0
  %v897 = vsel %vm432, %v866, 0
  %899 = vmatpush.msra.mxu0 0.0
  %900 = vmatpush.msra.mxu0 0.0
  %901 = vmatpush.msra.mxu0 0.0
  %902 = vmatpush.msra.mxu0 0.0
  %903 = vmatpush.msra.mxu0 0.0
  %904 = vmatpush.msra.mxu0 0.0
  %905 = vmatpush.msra.mxu0 0.0
  %906 = vmatpush.msra.mxu0 0.0
  %907 = vmatpush.msra.mxu0 0.0
  %908 = vmatpush.msra.mxu0 0.0
  %909 = vmatpush.msra.mxu0 0.0
  %910 = vmatpush.msra.mxu0 0.0
  %911 = vmatpush.msra.mxu0 %v875
  %912 = vmatpush.msra.mxu0 %v874
  %913 = vmatpush.msra.mxu0 %v873
  %914 = vmatpush.msra.mxu0 %v872
  %915 = vmatmul.f32.gmra.mxu0 %v888
  %v916 = vpop.f32.mrf.mxu0
  %v917 = vadd.f32 %v885, %v916
  %918 = vmatmul.f32.gmra.mxu0 %v891
  %v919 = vpop.f32.mrf.mxu0
  %v920 = vadd.f32 %v885, %v919
  %921 = vmatmul.f32.gmra.mxu0 %v894
  %v922 = vpop.f32.mrf.mxu0
  %v923 = vadd.f32 %v885, %v922
  %924 = vmatmul.f32.gmra.mxu0 %v897
  %v925 = vpop.f32.mrf.mxu0
  %v926 = vadd.f32 %v885, %v925
  %927 = vdwg.mxu0
  %928 = vmatpush.msra.mxu0 0.0
  %929 = vmatpush.msra.mxu0 0.0
  %930 = vmatpush.msra.mxu0 0.0
  %931 = vmatpush.msra.mxu0 0.0
  %932 = vmatpush.msra.mxu0 0.0
  %933 = vmatpush.msra.mxu0 0.0
  %934 = vmatpush.msra.mxu0 0.0
  %935 = vmatpush.msra.mxu0 0.0
  %936 = vmatpush.msra.mxu0 0.0
  %937 = vmatpush.msra.mxu0 0.0
  %938 = vmatpush.msra.mxu0 0.0
  %939 = vmatpush.msra.mxu0 0.0
  %940 = vmatpush.msra.mxu0 %v880
  %941 = vmatpush.msra.mxu0 %v879
  %942 = vmatpush.msra.mxu0 %v878
  %943 = vmatpush.msra.mxu0 %v877
  %944 = vmatmul.f32.gmra.mxu0 %v888
  %v945 = vpop.f32.mrf.mxu0
  %v946 = vadd.f32 0.0, %v945
  %947 = vmatmul.f32.gmra.mxu0 %v891
  %v948 = vpop.f32.mrf.mxu0
  %v949 = vadd.f32 0.0, %v948
  %950 = vmatmul.f32.gmra.mxu0 %v894
  %v951 = vpop.f32.mrf.mxu0
  %v952 = vadd.f32 0.0, %v951
  %953 = vmatmul.f32.gmra.mxu0 %v897
  %v954 = vpop.f32.mrf.mxu0
  %v955 = vadd.f32 0.0, %v954
  %956 = vdwg.mxu0
  %v958 = vsel %vm432, %v883, 0
  %960 = vmatpush.msra.mxu0 0.0
  %961 = vmatpush.msra.mxu0 0.0
  %962 = vmatpush.msra.mxu0 0.0
  %963 = vmatpush.msra.mxu0 0.0
  %964 = vmatpush.msra.mxu0 0.0
  %965 = vmatpush.msra.mxu0 0.0
  %966 = vmatpush.msra.mxu0 0.0
  %967 = vmatpush.msra.mxu0 0.0
  %968 = vmatpush.msra.mxu0 0.0
  %969 = vmatpush.msra.mxu0 0.0
  %970 = vmatpush.msra.mxu0 0.0
  %971 = vmatpush.msra.mxu0 0.0
  %972 = vmatpush.msra.mxu0 %v870
  %973 = vmatpush.msra.mxu0 %v869
  %974 = vmatpush.msra.mxu0 %v868
  %975 = vmatpush.msra.mxu0 %v867
  %976 = vmatmul.f32.gmra.mxu0 %v891
  %v977 = vpop.f32.mrf.mxu0
  %v978 = vadd.f32 %v946, %v977
  %979 = vmatmul.f32.gmra.mxu0 %v894
  %v980 = vpop.f32.mrf.mxu0
  %v981 = vadd.f32 %v949, %v980
  %982 = vmatmul.f32.gmra.mxu0 %v897
  %v983 = vpop.f32.mrf.mxu0
  %v984 = vadd.f32 %v952, %v983
  %985 = vmatmul.f32.gmra.mxu0 %v958
  %v986 = vpop.f32.mrf.mxu0
  %v987 = vadd.f32 %v955, %v986
  %988 = vdwg.mxu0
  %v989 = vadd.f32 %v978, %v885
  %v990 = vadd.f32 %v981, %v885
  %v991 = vadd.f32 %v984, %v885
  %v992 = vadd.f32 %v987, %v885
  %v993 = vmax.f32 %v917, 0.0
  %v994 = vmax.f32 %v920, 0.0
  %v995 = vmax.f32 %v923, 0.0
  %v996 = vmax.f32 %v926, 0.0
  %v997 = vmax.f32 %v989, 0.0
  %v998 = vmax.f32 %v990, 0.0
  %v999 = vmax.f32 %v991, 0.0
  %v1000 = vmax.f32 %v992, 0.0
  %v1001 = vld [vmem:[%s15] sm:$0x1]
  %s1002 = scalar_lea.vmem %s15, 1
  %v1003 = vld [vmem:[%s1002] sm:$0x1]
  %s1004 = scalar_lea.vmem %s15, 2
  %v1005 = vld [vmem:[%s1004] sm:$0x1]
  %v1006 = vld [vmem:[#allocation2] sm:$0x1]
  %v1007 = vlaneseq
  %v1008 = vand.u32 %v1007, 127
  %v1010 = vperm.slane %v1003, 0
  %v1012 = vmul.f32 %v993, %v1010
  %v1013 = vsel %vm285, %v1012, 0.0
  %1014 = vadd.xlane.f32.xlu0 %v1013
  %v1015 = vpop.xlane.xlu0 %1014
  %v1017 = vperm.slane %v1006, 0
  %v1019 = vadd.f32 %v1015, %v1017
  %v1021 = vperm.slane %v1001, 0
  %v1023 = vmul.f32 %v997, %v1021
  %v1025 = vperm.slane %v1005, 0
  %v1027 = vmul.f32 %v993, %v1025
  %v1028 = vadd.f32 %v1023, %v1027
  %v1029 = vsel %vm285, %v1028, 0.0
  %1030 = vadd.xlane.f32.xlu0 %v1029
  %v1031 = vpop.xlane.xlu0 %1030
  %v1032 = vadd.f32 %v1031, %v1017
  %vm1033 = vcmp.eq.s32.totalorder %v1008, 0
  %v1034 = vsel %vm1033, 1, 0
  %vm1035 = vcmp.eq.s32.totalorder %v1034, 1
  %1037 = vset.pattern.permute.xlu0 0
  %1038 = vperm.xlu0 %1037, %v1019
  %v1039 = vpop.permute.xlu0 %1038
  %v1041 = vsel %vm1035, %v1039, 0.0
  %v1042 = vadd.f32 %v1041, 0.0
  %vm1043 = vcmp.eq.s32.totalorder %v1008, 1
  %v1044 = vsel %vm1043, 1, 0
  %vm1045 = vcmp.eq.s32.totalorder %v1044, 1
  %1047 = vset.pattern.permute.xlu0 0
  %1048 = vperm.xlu0 %1047, %v1032
  %v1049 = vpop.permute.xlu0 %1048
  %v1051 = vsel %vm1045, %v1049, 0.0
  %v1052 = vadd.f32 %v1042, %v1051
  %v1053 = vmul.f32 %v997, %v1010
  %v1054 = vsel %vm285, %v1053, 0.0
  %1055 = vadd.xlane.f32.xlu0 %v1054
  %v1056 = vpop.xlane.xlu0 %1055
  %v1057 = vadd.f32 %v1056, %v1017
  %v1058 = vmul.f32 %v994, %v1021
  %v1059 = vmul.f32 %v997, %v1025
  %v1060 = vadd.f32 %v1058, %v1059
  %v1061 = vsel %vm285, %v1060, 0.0
  %1062 = vadd.xlane.f32.xlu0 %v1061
  %v1063 = vpop.xlane.xlu0 %1062
  %v1064 = vadd.f32 %v1063, %v1017
  %vm1065 = vcmp.eq.s32.totalorder %v1008, 2
  %v1066 = vsel %vm1065, 1, 0
  %vm1067 = vcmp.eq.s32.totalorder %v1066, 1
  %1069 = vset.pattern.permute.xlu0 0
  %1070 = vperm.xlu0 %1069, %v1057
  %v1071 = vpop.permute.xlu0 %1070
  %v1073 = vsel %vm1067, %v1071, 0.0
  %v1074 = vadd.f32 %v1052, %v1073
  %vm1075 = vcmp.eq.s32.totalorder %v1008, 3
  %v1076 = vsel %vm1075, 1, 0
  %vm1077 = vcmp.eq.s32.totalorder %v1076, 1
  %1079 = vset.pattern.permute.xlu0 0
  %1080 = vperm.xlu0 %1079, %v1064
  %v1081 = vpop.permute.xlu0 %1080
  %v1083 = vsel %vm1077, %v1081, 0.0
  %v1084 = vadd.f32 %v1074, %v1083
  %v1085 = vmul.f32 %v994, %v1010
  %v1086 = vsel %vm285, %v1085, 0.0
  %1087 = vadd.xlane.f32.xlu0 %v1086
  %v1088 = vpop.xlane.xlu0 %1087
  %v1089 = vadd.f32 %v1088, %v1017
  %v1090 = vmul.f32 %v998, %v1021
  %v1091 = vmul.f32 %v994, %v1025
  %v1092 = vadd.f32 %v1090, %v1091
  %v1093 = vsel %vm285, %v1092, 0.0
  %1094 = vadd.xlane.f32.xlu0 %v1093
  %v1095 = vpop.xlane.xlu0 %1094
  %v1096 = vadd.f32 %v1095, %v1017
  %vm1097 = vcmp.eq.s32.totalorder %v1008, 4
  %v1098 = vsel %vm1097, 1, 0
  %vm1099 = vcmp.eq.s32.totalorder %v1098, 1
  %1101 = vset.pattern.permute.xlu0 0
  %1102 = vperm.xlu0 %1101, %v1089
  %v1103 = vpop.permute.xlu0 %1102
  %v1105 = vsel %vm1099, %v1103, 0.0
  %v1106 = vadd.f32 %v1084, %v1105
  %vm1107 = vcmp.eq.s32.totalorder %v1008, 5
  %v1108 = vsel %vm1107, 1, 0
  %vm1109 = vcmp.eq.s32.totalorder %v1108, 1
  %1111 = vset.pattern.permute.xlu0 0
  %1112 = vperm.xlu0 %1111, %v1096
  %v1113 = vpop.permute.xlu0 %1112
  %v1115 = vsel %vm1109, %v1113, 0.0
  %v1116 = vadd.f32 %v1106, %v1115
  %v1117 = vmul.f32 %v998, %v1010
  %v1118 = vsel %vm285, %v1117, 0.0
  %1119 = vadd.xlane.f32.xlu0 %v1118
  %v1120 = vpop.xlane.xlu0 %1119
  %v1121 = vadd.f32 %v1120, %v1017
  %v1122 = vmul.f32 %v995, %v1021
  %v1123 = vmul.f32 %v998, %v1025
  %v1124 = vadd.f32 %v1122, %v1123
  %v1125 = vsel %vm285, %v1124, 0.0
  %1126 = vadd.xlane.f32.xlu0 %v1125
  %v1127 = vpop.xlane.xlu0 %1126
  %v1128 = vadd.f32 %v1127, %v1017
  %vm1129 = vcmp.eq.s32.totalorder %v1008, 6
  %v1130 = vsel %vm1129, 1, 0
  %vm1131 = vcmp.eq.s32.totalorder %v1130, 1
  %1133 = vset.pattern.permute.xlu0 0
  %1134 = vperm.xlu0 %1133, %v1121
  %v1135 = vpop.permute.xlu0 %1134
  %v1137 = vsel %vm1131, %v1135, 0.0
  %v1138 = vadd.f32 %v1116, %v1137
  %vm1139 = vcmp.eq.s32.totalorder %v1008, 7
  %v1140 = vsel %vm1139, 1, 0
  %vm1141 = vcmp.eq.s32.totalorder %v1140, 1
  %1143 = vset.pattern.permute.xlu0 0
  %1144 = vperm.xlu0 %1143, %v1128
  %v1145 = vpop.permute.xlu0 %1144
  %v1147 = vsel %vm1141, %v1145, 0.0
  %v1148 = vadd.f32 %v1138, %v1147
  %v1149 = vmul.f32 %v995, %v1010
  %v1150 = vsel %vm285, %v1149, 0.0
  %1151 = vadd.xlane.f32.xlu0 %v1150
  %v1152 = vpop.xlane.xlu0 %1151
  %v1153 = vadd.f32 %v1152, %v1017
  %v1154 = vmul.f32 %v999, %v1021
  %v1155 = vmul.f32 %v995, %v1025
  %v1156 = vadd.f32 %v1154, %v1155
  %v1157 = vsel %vm285, %v1156, 0.0
  %1158 = vadd.xlane.f32.xlu0 %v1157
  %v1159 = vpop.xlane.xlu0 %1158
  %v1160 = vadd.f32 %v1159, %v1017
  %vm1161 = vcmp.eq.s32.totalorder %v1008, 8
  %v1162 = vsel %vm1161, 1, 0
  %vm1163 = vcmp.eq.s32.totalorder %v1162, 1
  %1165 = vset.pattern.permute.xlu0 0
  %1166 = vperm.xlu0 %1165, %v1153
  %v1167 = vpop.permute.xlu0 %1166
  %v1169 = vsel %vm1163, %v1167, 0.0
  %v1170 = vadd.f32 %v1148, %v1169
  %vm1171 = vcmp.eq.s32.totalorder %v1008, 9
  %v1172 = vsel %vm1171, 1, 0
  %vm1173 = vcmp.eq.s32.totalorder %v1172, 1
  %1175 = vset.pattern.permute.xlu0 0
  %1176 = vperm.xlu0 %1175, %v1160
  %v1177 = vpop.permute.xlu0 %1176
  %v1179 = vsel %vm1173, %v1177, 0.0
  %v1180 = vadd.f32 %v1170, %v1179
  %v1181 = vmul.f32 %v999, %v1010
  %v1182 = vsel %vm285, %v1181, 0.0
  %1183 = vadd.xlane.f32.xlu0 %v1182
  %v1184 = vpop.xlane.xlu0 %1183
  %v1185 = vadd.f32 %v1184, %v1017
  %v1186 = vmul.f32 %v996, %v1021
  %v1187 = vmul.f32 %v999, %v1025
  %v1188 = vadd.f32 %v1186, %v1187
  %v1189 = vsel %vm285, %v1188, 0.0
  %1190 = vadd.xlane.f32.xlu0 %v1189
  %v1191 = vpop.xlane.xlu0 %1190
  %v1192 = vadd.f32 %v1191, %v1017
  %vm1193 = vcmp.eq.s32.totalorder %v1008, 10
  %v1194 = vsel %vm1193, 1, 0
  %vm1195 = vcmp.eq.s32.totalorder %v1194, 1
  %1197 = vset.pattern.permute.xlu0 0
  %1198 = vperm.xlu0 %1197, %v1185
  %v1199 = vpop.permute.xlu0 %1198
  %v1201 = vsel %vm1195, %v1199, 0.0
  %v1202 = vadd.f32 %v1180, %v1201
  %vm1203 = vcmp.eq.s32.totalorder %v1008, 11
  %v1204 = vsel %vm1203, 1, 0
  %vm1205 = vcmp.eq.s32.totalorder %v1204, 1
  %1207 = vset.pattern.permute.xlu0 0
  %1208 = vperm.xlu0 %1207, %v1192
  %v1209 = vpop.permute.xlu0 %1208
  %v1211 = vsel %vm1205, %v1209, 0.0
  %v1212 = vadd.f32 %v1202, %v1211
  %v1213 = vmul.f32 %v996, %v1010
  %v1214 = vsel %vm285, %v1213, 0.0
  %1215 = vadd.xlane.f32.xlu0 %v1214
  %v1216 = vpop.xlane.xlu0 %1215
  %v1217 = vadd.f32 %v1216, %v1017
  %v1218 = vmul.f32 %v1000, %v1021
  %v1219 = vmul.f32 %v996, %v1025
  %v1220 = vadd.f32 %v1218, %v1219
  %v1221 = vsel %vm285, %v1220, 0.0
  %1222 = vadd.xlane.f32.xlu0 %v1221
  %v1223 = vpop.xlane.xlu0 %1222
  %v1224 = vadd.f32 %v1223, %v1017
  %vm1225 = vcmp.eq.s32.totalorder %v1008, 12
  %v1226 = vsel %vm1225, 1, 0
  %vm1227 = vcmp.eq.s32.totalorder %v1226, 1
  %1229 = vset.pattern.permute.xlu0 0
  %1230 = vperm.xlu0 %1229, %v1217
  %v1231 = vpop.permute.xlu0 %1230
  %v1233 = vsel %vm1227, %v1231, 0.0
  %v1234 = vadd.f32 %v1212, %v1233
  %vm1235 = vcmp.eq.s32.totalorder %v1008, 13
  %v1236 = vsel %vm1235, 1, 0
  %vm1237 = vcmp.eq.s32.totalorder %v1236, 1
  %1239 = vset.pattern.permute.xlu0 0
  %1240 = vperm.xlu0 %1239, %v1224
  %v1241 = vpop.permute.xlu0 %1240
  %v1243 = vsel %vm1237, %v1241, 0.0
  %v1244 = vadd.f32 %v1234, %v1243
  %v1245 = vrot.slane %v993, 1
  %v1246 = vsel %vm683, 0.0, %v1245
  %v1247 = vmul.f32 %v1000, %v1010
  %v1248 = vsel %vm285, %v1247, 0.0
  %1249 = vadd.xlane.f32.xlu0 %v1248
  %v1250 = vpop.xlane.xlu0 %1249
  %v1251 = vadd.f32 %v1250, %v1017
  %v1252 = vmul.f32 %v1246, %v1021
  %v1253 = vmul.f32 %v1000, %v1025
  %v1254 = vadd.f32 %v1252, %v1253
  %v1255 = vsel %vm285, %v1254, 0.0
  %1256 = vadd.xlane.f32.xlu0 %v1255
  %v1257 = vpop.xlane.xlu0 %1256
  %v1258 = vadd.f32 %v1257, %v1017
  %vm1259 = vcmp.eq.s32.totalorder %v1008, 14
  %v1260 = vsel %vm1259, 1, 0
  %vm1261 = vcmp.eq.s32.totalorder %v1260, 1
  %1263 = vset.pattern.permute.xlu0 0
  %1264 = vperm.xlu0 %1263, %v1251
  %v1265 = vpop.permute.xlu0 %1264
  %v1267 = vsel %vm1261, %v1265, 0.0
  %v1268 = vadd.f32 %v1244, %v1267
  %vm1269 = vcmp.eq.s32.totalorder %v1008, 15
  %v1270 = vsel %vm1269, 1, 0
  %vm1271 = vcmp.eq.s32.totalorder %v1270, 1
  %1273 = vset.pattern.permute.xlu0 0
  %1274 = vperm.xlu0 %1273, %v1258
  %v1275 = vpop.permute.xlu0 %1274
  %v1277 = vsel %vm1271, %v1275, 0.0
  %v1278 = vadd.f32 %v1268, %v1277
  %1279 = vst.msk [vmem:[%s17] sm:$0xff] %vm285, %v1278
  // Predicated region
  $region70: #{autoencoder_forward.1} parent=0 // pred_check
    _
  $region71: #{autoencoder_forward.1} parent=0 // pred_check_branch
    %1281 = sbr.rel (0) target = $region73
  $region72: #{autoencoder_forward.1} parent=0 // pred_region
    _
  $region73: #{autoencoder_forward.1} parent=0 // pred_fallthru
    _
  // Predicated region
  $region74: #{autoencoder_forward.1} parent=0 // pred_check
    _
  $region75: #{autoencoder_forward.1} parent=0 // pred_check_branch
    %1283 = sbr.rel (0) target = $region77
  $region76: #{autoencoder_forward.1} parent=0 // pred_region
    _
  $region77: #{autoencoder_forward.1} parent=0 // pred_fallthru
    _

</llo_original>
